<compile_context>
chip_gen: v7x
topology: tpu7x:2x2x1
jax: 0.10.0
libtpu: 0.0.40
codegen_flags: <defaults>
</compile_context>

<pallas_src>
import math
import functools

import numpy as np
import jax
import jax.numpy as jnp
from jax import lax
from jax.experimental import pallas as pl
from jax.experimental.pallas import tpu as pltpu

# ---- hyper-params consistent with the module ----
N_FEATURES = 8          # params['n_features']
N_CLASSES = 4           # params['n_classes']
CONTEXT_DIM = 16        # params['context_dim'] (unused by the live forward path)
TRANS_DIM = 32          # params['trans_dim'] == new_rnn hidden size
H = TRANS_DIM


# -----------------------------------------------------------------------------
# Pallas kernel: 2-layer bidirectional LSTM followed by output_first_fc
# (Linear(2H -> 1)) applied to h[-1].  Packed gate order is [i, f, o, g]
# (sigmoid gates first, tanh gate last).
# -----------------------------------------------------------------------------
def lstm_head_kernel(x_ref, w_ref, b_ref, wout_ref, bout_ref, out_ref,
                     gx0_s, gx1_s, h01_s, *, seq_len, batch, r_in):
    T, N = seq_len, batch
    H2, H3, H4, H6, H8 = 2 * H, 3 * H, 4 * H, 6 * H, 8 * H
    f32, bf16 = jnp.float32, jnp.bfloat16

    # ---- packed-weight views (loaded once, loop-invariant) ----
    o1 = r_in            # end of layer-0 fused input-projection block
    o2 = o1 + H2         # end of layer-0 block-diag recurrence block
    o3 = o2 + H2         # end of layer-1 input-projection block
    w0_in = w_ref[0:o1, :]                  # (2F_pad, 8H)  layer-0 input proj, both dirs
    w0_rec = w_ref[o1:o2, :]                # (2H, 8H)      layer-0 block-diag recurrence
    w1_in = w_ref[o2:o3, :]                 # (2H, 8H)      layer-1 input proj [fwd 4H | bwd 4H]
    w1_rec = w_ref[o3:o3 + H, :][:, 0:H4]   # (H, 4H)       layer-1 forward recurrence (whh1f)
    b0 = b_ref[0:1, :]                      # (1, 8H) gate-grouped merged biases, layer 0
    b1 = b_ref[8:9, :]                      # (1, 8H) [b1f | b1b]

    # ---- hoisted layer-0 input projection: one matmul, biases folded in ----
    gx0_s[...] = jnp.dot(x_ref[...], w0_in, preferred_element_type=f32) + b0

    # ---- layer 0: forward and backward directions fused in one unrolled loop ----
    zeros2 = jnp.zeros((N, H2), f32)

    def body0(s, carry):
        h_cat, c_cat = carry                                   # (N, 2H)  [fwd | bwd]
        row_f = pl.multiple_of(s * N, N)                       # time s       (forward)
        row_b = pl.multiple_of((T - 1 - s) * N, N)             # time T-1-s   (backward)
        gates = (gx0_s[pl.ds(row_f, N), :]
                 + jnp.dot(h_cat.astype(bf16), w0_rec, preferred_element_type=f32))
        # gate-grouped layout: [ i(2H) | f(2H) | o(2H) | g(2H) ], each half [fwd | bwd]
        sg = jax.nn.sigmoid(gates[:, 0:H6])                    # i, f, o in one EUP pass
        gg = jnp.tanh(gates[:, H6:H8])                         # g
        c_cat = sg[:, H2:H4] * c_cat + sg[:, 0:H2] * gg
        h_cat = sg[:, H4:H6] * jnp.tanh(c_cat)
        h01_s[pl.ds(row_f, N), 0:H] = h_cat[:, 0:H]            # fwd output at time s
        h01_s[pl.ds(row_b, N), H:H2] = h_cat[:, H:H2]          # bwd output at time T-1-s
        return h_cat, c_cat

    lax.fori_loop(0, T, body0, (zeros2, zeros2), unroll=True)

    # ---- hoisted layer-1 input projection for BOTH directions: one matmul ----
    gx1_s[...] = (jnp.dot(h01_s[...].astype(bf16), w1_in, preferred_element_type=f32)
                  + b1)

    # ---- layer 1, forward direction: only the final carry h1f(T-1) is needed ----
    zeros1 = jnp.zeros((N, H), f32)

    def body1(t, carry):
        h, c = carry
        row = pl.multiple_of(t * N, N)
        gates = (gx1_s[pl.ds(row, N), :][:, 0:H4]
                 + jnp.dot(h.astype(bf16), w1_rec, preferred_element_type=f32))
        sg = jax.nn.sigmoid(gates[:, 0:H3])                    # i, f, o
        gg = jnp.tanh(gates[:, H3:H4])                         # g
        c = sg[:, H:H2] * c + sg[:, 0:H] * gg
        h = sg[:, H2:H3] * jnp.tanh(c)
        return h, c

    h1f, _ = lax.fori_loop(0, T, body1, (zeros1, zeros1), unroll=True)

    # ---- layer 1, backward direction: its value at t = T-1 is its FIRST step
    #      (zero initial state), so the recurrent term vanishes exactly. ----
    g_last = gx1_s[pl.ds((T - 1) * N, N), :][:, H4:H8]
    sg_b = jax.nn.sigmoid(g_last[:, 0:H3])
    gg_b = jnp.tanh(g_last[:, H3:H4])
    c1b = sg_b[:, 0:H] * gg_b                                  # f*0 + i*g
    h1b = sg_b[:, H2:H3] * jnp.tanh(c1b)

    # ---- output_first_fc on h[-1] = [h1f | h1b]  (split dot avoids the concat) ----
    out_ref[...] = (jnp.dot(h1f, wout_ref[0:H, :], preferred_element_type=f32)
                    + jnp.dot(h1b, wout_ref[H:H2, :], preferred_element_type=f32)
                    + bout_ref[...])


# -----------------------------------------------------------------------------
# Host-side packing of PyTorch-convention LSTM / Linear params into the kernel's
# two packed VMEM buffers.  PyTorch gate column order (after transpose) is
# [i, f, g, o]; the kernel uses [i, f, o, g].  bias_ih and bias_hh of each
# layer/direction are SUMMED into one bias (required if importing real nn.LSTM
# weights).
# -----------------------------------------------------------------------------
_GATE_ORDER = (0, 1, 3, 2)   # kernel gate position -> PyTorch gate index (i, f, o, g)


def pack_params(tp):
    def wT(name):
        return jnp.asarray(tp[name], jnp.float32).T            # (in, 4H)

    def merged_bias(suffix):
        return (jnp.asarray(tp['bias_ih_' + suffix], jnp.float32)
                + jnp.asarray(tp['bias_hh_' + suffix], jnp.float32))[None, :]

    def gate_reorder(w):
        # (r, 4H) in PyTorch order [i f g o] -> (r, 4H) kernel order [i f o g]
        return jnp.concatenate([w[:, g * H:(g + 1) * H] for g in _GATE_ORDER], axis=1)

    wih0f, whh0f = wT('weight_ih_l0'), wT('weight_hh_l0')
    wih0b, whh0b = wT('weight_ih_l0_reverse'), wT('weight_hh_l0_reverse')
    wih1f, whh1f = wT('weight_ih_l1'), wT('weight_hh_l1')
    wih1b = wT('weight_ih_l1_reverse')
    b0f, b0b = merged_bias('l0'), merged_bias('l0_reverse')
    b1f, b1b = merged_bias('l1'), merged_bias('l1_reverse')

    F = wih0f.shape[0]

    def gate_interleave(fwd, bwd):
        # (r, 4H) x 2 -> (r, 8H) laid out as [i_f i_b | f_f f_b | o_f o_b | g_f g_b]
        blocks = []
        for g in _GATE_ORDER:
            blocks.append(fwd[:, g * H:(g + 1) * H])
            blocks.append(bwd[:, g * H:(g + 1) * H])
        return jnp.concatenate(blocks, axis=1)

    zF = jnp.zeros((F, 4 * H), jnp.float32)
    zH = jnp.zeros((H, 4 * H), jnp.float32)
    # rows 0:F act on x[t] (forward gate lanes only); rows F:2F act on x[T-1-t]
    w0_in = jnp.concatenate([gate_interleave(wih0f, zF),
                             gate_interleave(zF, wih0b)], axis=0)      # (2F, 8H)
    # block-diagonal recurrence for the fused carry h_cat = [h_f | h_b]
    w0_rec = jnp.concatenate([gate_interleave(whh0f, zH),
                              gate_interleave(zH, whh0b)], axis=0)     # (2H, 8H)
    b0 = gate_interleave(b0f, b0b)                                     # (1, 8H)

    w1_in = jnp.concatenate([gate_reorder(wih1f),
                             gate_reorder(wih1b)], axis=1)             # (2H, 8H)
    b1 = jnp.concatenate([gate_reorder(b1f), gate_reorder(b1b)], axis=1)   # (1, 8H)
    w1_rec = jnp.concatenate([gate_reorder(whh1f),
                              jnp.zeros_like(whh1f)], axis=1)          # (H, 8H) lane-padded

    # align the fused input-projection block to the bf16 (16, 128) tile
    r_in = 2 * F + ((-2 * F) % 16)
    w0_in = jnp.pad(w0_in, ((0, r_in - 2 * F), (0, 0)))

    w_pack = jnp.concatenate([w0_in, w0_rec, w1_in, w1_rec],
                             axis=0).astype(jnp.bfloat16)              # (r_in + 5H, 8H)
    b_pack = jnp.zeros((16, 8 * H), jnp.float32).at[0:1].set(b0).at[8:9].set(b1)

    return dict(
        w=w_pack, b=b_pack,
        wout=jnp.asarray(tp['out_w'], jnp.float32).T,                  # (2H, 1)
        bout=jnp.asarray(tp['out_b'], jnp.float32).reshape(1, 1),
        r_in=r_in)


# -----------------------------------------------------------------------------
# Wrapper mirroring the live part of Model.forward
# -----------------------------------------------------------------------------
def model_forward(packed, passer_input, teammate_input, opponent_input,
                  ball_input, team_poss_input, event_player_input):
    # batch-first (B, T, *) -> seq-first (T, B, *), as the PyTorch forward does
    passer = jnp.transpose(passer_input, (1, 0, 2))
    teammate = jnp.transpose(teammate_input, (1, 0, 2))
    T, B, F = passer.shape
    nt = teammate.shape[2] // F
    N = B * nt
    r_in = packed['r_in']

    x = teammate.reshape(T, N, F).astype(jnp.float32)
    # fuse x with its time-reverse so one matmul row carries both directions' inputs
    x_fused = jnp.concatenate([x, x[::-1]], axis=-1)                   # (T, N, 2F)
    if r_in > 2 * F:
        x_fused = jnp.pad(x_fused, ((0, 0), (0, 0), (0, r_in - 2 * F)))
    x2d = x_fused.reshape(T * N, r_in).astype(jnp.bfloat16)

    kernel = functools.partial(lstm_head_kernel, seq_len=T, batch=N, r_in=r_in)
    out = pl.pallas_call(
        kernel,
        out_shape=jax.ShapeDtypeStruct((N, 1), jnp.float32),
        in_specs=[pl.BlockSpec(memory_space=pltpu.MemorySpace.VMEM)] * 5,
        out_specs=pl.BlockSpec(memory_space=pltpu.MemorySpace.VMEM),
        scratch_shapes=[pltpu.VMEM((T * N, 8 * H), jnp.float32),   # layer-0 x-gates (both dirs)
                        pltpu.VMEM((T * N, 8 * H), jnp.float32),   # layer-1 x-gates (both dirs)
                        pltpu.VMEM((T * N, 2 * H), jnp.float32)],  # layer-0 outputs [fwd | bwd]
    )(x2d, packed['w'], packed['b'], packed['wout'], packed['bout'])

    return out.reshape(B, nt)


# -----------------------------------------------------------------------------
# Pure-JAX reference (same bf16-operand / f32-accumulate matmul precision)
# -----------------------------------------------------------------------------
def lstm_head_ref(x, tp):
    bf16, f32 = jnp.bfloat16, jnp.float32

    def run(xs, w_ih, w_hh, b_ih, b_hh, reverse):
        wih = jnp.asarray(w_ih, f32).T.astype(bf16)
        whh = jnp.asarray(w_hh, f32).T.astype(bf16)
        b = (jnp.asarray(b_ih, f32) + jnp.asarray(b_hh, f32))[None, :]
        seq = xs[::-1] if reverse else xs
        zeros = jnp.zeros((xs.shape[1], H), f32)

        def step(carry, x_t):
            h, c = carry
            gates = (jnp.dot(x_t.astype(bf16), wih, preferred_element_type=f32)
                     + jnp.dot(h.astype(bf16), whh, preferred_element_type=f32) + b)
            i = jax.nn.sigmoid(gates[:, 0:H])
            f = jax.nn.sigmoid(gates[:, H:2 * H])
            g = jnp.tanh(gates[:, 2 * H:3 * H])
            o = jax.nn.sigmoid(gates[:, 3 * H:4 * H])
            c = f * c + i * g
            h = o * jnp.tanh(c)
            return (h, c), h

        _, hs = lax.scan(step, (zeros, zeros), seq)
        return hs[::-1] if reverse else hs

    f0 = run(x, tp['weight_ih_l0'], tp['weight_hh_l0'],
             tp['bias_ih_l0'], tp['bias_hh_l0'], False)
    b0 = run(x, tp['weight_ih_l0_reverse'], tp['weight_hh_l0_reverse'],
             tp['bias_ih_l0_reverse'], tp['bias_hh_l0_reverse'], True)
    x1 = jnp.concatenate([f0, b0], axis=-1)
    f1 = run(x1, tp['weight_ih_l1'], tp['weight_hh_l1'],
             tp['bias_ih_l1'], tp['bias_hh_l1'], False)
    b1 = run(x1, tp['weight_ih_l1_reverse'], tp['weight_hh_l1_reverse'],
             tp['bias_ih_l1_reverse'], tp['bias_hh_l1_reverse'], True)
    h_last = jnp.concatenate([f1[-1], b1[-1]], axis=-1)
    return (h_last @ jnp.asarray(tp['out_w'], jnp.float32).T
            + jnp.asarray(tp['out_b'], jnp.float32))


def make_torch_params(key):
    k = 1.0 / math.sqrt(H)
    shapes = dict(
        weight_ih_l0=(4 * H, N_FEATURES), weight_hh_l0=(4 * H, H),
        bias_ih_l0=(4 * H,), bias_hh_l0=(4 * H,),
        weight_ih_l0_reverse=(4 * H, N_FEATURES), weight_hh_l0_reverse=(4 * H, H),
        bias_ih_l0_reverse=(4 * H,), bias_hh_l0_reverse=(4 * H,),
        weight_ih_l1=(4 * H, 2 * H), weight_hh_l1=(4 * H, H),
        bias_ih_l1=(4 * H,), bias_hh_l1=(4 * H,),
        weight_ih_l1_reverse=(4 * H, 2 * H), weight_hh_l1_reverse=(4 * H, H),
        bias_ih_l1_reverse=(4 * H,), bias_hh_l1_reverse=(4 * H,),
        out_w=(1, 2 * H), out_b=(1,),
    )
    keys = jax.random.split(key, len(shapes))
    return {name: jax.random.uniform(kk, shp, jnp.float32, -k, k)
            for kk, (name, shp) in zip(keys, shapes.items())}


if __name__ == "__main__":
    key = jax.random.PRNGKey(0)
    B, T = 2, 8
    n_teammates, n_opponents = 4, 4

    kx = jax.random.split(key, 7)
    passer_input = jax.random.normal(kx[0], (B, T, N_FEATURES), jnp.float32)
    teammate_input = jax.random.normal(kx[1], (B, T, n_teammates * N_FEATURES), jnp.float32)
    opponent_input = jax.random.normal(kx[2], (B, T, n_opponents * N_FEATURES), jnp.float32)
    ball_input = jax.random.normal(kx[3], (B, T, 2), jnp.float32)
    team_poss_input = jax.random.normal(kx[4], (B, T, N_CLASSES), jnp.float32)
    event_player_input = jax.random.normal(kx[5], (B, T, N_CLASSES), jnp.float32)

    torch_params = make_torch_params(kx[6])
    packed = pack_params(torch_params)

    out = model_forward(packed, passer_input, teammate_input, opponent_input,
                        ball_input, team_poss_input, event_player_input)
    out = jax.block_until_ready(out)
    assert out.shape == (B, n_teammates), out.shape

    # sanity check vs pure-JAX reference
    x_ref_in = jnp.transpose(teammate_input, (1, 0, 2)).reshape(T, B * n_teammates, N_FEATURES)
    ref = lstm_head_ref(x_ref_in, torch_params).reshape(B, n_teammates)
    np.testing.assert_allclose(np.asarray(out), np.asarray(ref), rtol=1e-2, atol=1e-2)

    print("KERNEL_OK")
</pallas_src>

<mosaic_0001>
module attributes {stable_mosaic.version = 11 : i64} {
  func.func @lstm_head_kernel(%arg0: memref<64x16xbf16, #tpu.memory_space<vmem>>, %arg1: memref<176x256xbf16, #tpu.memory_space<vmem>>, %arg2: memref<16x256xf32, #tpu.memory_space<vmem>>, %arg3: memref<64x1xf32, #tpu.memory_space<vmem>>, %arg4: memref<1x1xf32, #tpu.memory_space<vmem>>, %arg5: memref<8x1xf32, #tpu.memory_space<vmem>>, %arg6: memref<64x256xf32, #tpu.memory_space<vmem>>, %arg7: memref<64x256xf32, #tpu.memory_space<vmem>>, %arg8: memref<64x64xf32, #tpu.memory_space<vmem>>) attributes {dimension_semantics = [], scalar_prefetch = 0 : i64, scratch_operands = 3 : i64, tpu.core_type = #tpu.core_type<tc>} {
    %c0 = arith.constant 0 : index
    %c0_0 = arith.constant 0 : index
    %0 = vector.load %arg1[%c0, %c0_0] : memref<176x256xbf16, #tpu.memory_space<vmem>>, vector<16x256xbf16>
    %c16 = arith.constant 16 : index
    %c0_1 = arith.constant 0 : index
    %1 = vector.load %arg1[%c16, %c0_1] : memref<176x256xbf16, #tpu.memory_space<vmem>>, vector<64x256xbf16>
    %c80 = arith.constant 80 : index
    %c0_2 = arith.constant 0 : index
    %2 = vector.load %arg1[%c80, %c0_2] : memref<176x256xbf16, #tpu.memory_space<vmem>>, vector<64x256xbf16>
    %c144 = arith.constant 144 : index
    %c0_3 = arith.constant 0 : index
    %3 = vector.load %arg1[%c144, %c0_3] : memref<176x256xbf16, #tpu.memory_space<vmem>>, vector<32x256xbf16>
    %4 = vector.extract_strided_slice %3 {offsets = [0, 0], sizes = [32, 128], strides = [1, 1]} : vector<32x256xbf16> to vector<32x128xbf16>
    %c0_4 = arith.constant 0 : index
    %c0_5 = arith.constant 0 : index
    %5 = vector.load %arg2[%c0_4, %c0_5] : memref<16x256xf32, #tpu.memory_space<vmem>>, vector<1x256xf32>
    %c8 = arith.constant 8 : index
    %c0_6 = arith.constant 0 : index
    %6 = vector.load %arg2[%c8, %c0_6] : memref<16x256xf32, #tpu.memory_space<vmem>>, vector<1x256xf32>
    %c0_7 = arith.constant 0 : index
    %c0_8 = arith.constant 0 : index
    %7 = vector.load %arg0[%c0_7, %c0_8] : memref<64x16xbf16, #tpu.memory_space<vmem>>, vector<64x16xbf16>
    %cst = arith.constant dense<0.000000e+00> : vector<64x256xf32>
    %8 = tpu.matmul %7, %0, %cst {dimension_numbers = #tpu.dot_dimension_numbers<[1], [0], [0], [1], [0, 0, 1, 1], [], []>} : vector<64x16xbf16>, vector<16x256xbf16>, vector<64x256xf32> -> vector<64x256xf32>
    %9 = vector.broadcast %5 : vector<1x256xf32> to vector<64x256xf32>
    %10 = arith.addf %8, %9 : vector<64x256xf32>
    %c0_9 = arith.constant 0 : index
    %c0_10 = arith.constant 0 : index
    %11 = vector.load %arg6[%c0_9, %c0_10] : memref<64x256xf32, #tpu.memory_space<vmem>>, vector<64x256xf32>
    tpu.vector_store %arg6[%c0_9, %c0_10], %10 {strides = array<i32>} : memref<64x256xf32, #tpu.memory_space<vmem>>, vector<64x256xf32>,
    %cst_11 = arith.constant 0.000000e+00 : f32
    %12 = vector.broadcast %cst_11 : f32 to vector<8x64xf32>
    %c0_i32 = arith.constant 0 : i32
    %c8_i32 = arith.constant 8 : i32
    %13 = arith.muli %c0_i32, %c8_i32 : i32
    %14 = tpu.assume_multiple %13, 8 : i32
    %c7_i32 = arith.constant 7 : i32
    %15 = arith.subi %c7_i32, %c0_i32 : i32
    %c8_i32_12 = arith.constant 8 : i32
    %16 = arith.muli %15, %c8_i32_12 : i32
    %17 = tpu.assume_multiple %16, 8 : i32
    %18 = arith.index_cast %14 : i32 to index
    %c0_13 = arith.constant 0 : index
    %19 = vector.load %arg6[%18, %c0_13] : memref<64x256xf32, #tpu.memory_space<vmem>>, vector<8x256xf32>
    %20 = arith.truncf %12 : vector<8x64xf32> to vector<8x64xbf16>
    %cst_14 = arith.constant dense<0.000000e+00> : vector<8x256xf32>
    %21 = tpu.matmul %20, %1, %cst_14 {dimension_numbers = #tpu.dot_dimension_numbers<[1], [0], [0], [1], [0, 0, 1, 1], [], []>} : vector<8x64xbf16>, vector<64x256xbf16>, vector<8x256xf32> -> vector<8x256xf32>
    %22 = arith.addf %19, %21 : vector<8x256xf32>
    %23 = vector.extract_strided_slice %22 {offsets = [0, 0], sizes = [8, 192], strides = [1, 1]} : vector<8x256xf32> to vector<8x192xf32>
    %24 = arith.negf %23 : vector<8x192xf32>
    %25 = math.exp %24 : vector<8x192xf32>
    %cst_15 = arith.constant 1.000000e+00 : f32
    %26 = vector.broadcast %cst_15 : f32 to vector<8x192xf32>
    %27 = arith.addf %26, %25 : vector<8x192xf32>
    %28 = arith.divf %26, %27 : vector<8x192xf32>
    %29 = vector.extract_strided_slice %22 {offsets = [0, 192], sizes = [8, 64], strides = [1, 1]} : vector<8x256xf32> to vector<8x64xf32>
    %30 = math.tanh %29 : vector<8x64xf32>
    %31 = vector.extract_strided_slice %28 {offsets = [0, 64], sizes = [8, 64], strides = [1, 1]} : vector<8x192xf32> to vector<8x64xf32>
    %32 = arith.mulf %31, %12 : vector<8x64xf32>
    %33 = vector.extract_strided_slice %28 {offsets = [0, 0], sizes = [8, 64], strides = [1, 1]} : vector<8x192xf32> to vector<8x64xf32>
    %34 = arith.mulf %33, %30 : vector<8x64xf32>
    %35 = arith.addf %32, %34 : vector<8x64xf32>
    %36 = vector.extract_strided_slice %28 {offsets = [0, 128], sizes = [8, 64], strides = [1, 1]} : vector<8x192xf32> to vector<8x64xf32>
    %37 = math.tanh %35 : vector<8x64xf32>
    %38 = arith.mulf %36, %37 : vector<8x64xf32>
    %39 = vector.extract_strided_slice %38 {offsets = [0, 0], sizes = [8, 32], strides = [1, 1]} : vector<8x64xf32> to vector<8x32xf32>
    %40 = arith.index_cast %14 : i32 to index
    %c0_16 = arith.constant 0 : index
    %41 = vector.load %arg8[%40, %c0_16] : memref<64x64xf32, #tpu.memory_space<vmem>>, vector<8x32xf32>
    tpu.vector_store %arg8[%40, %c0_16], %39 {strides = array<i32>} : memref<64x64xf32, #tpu.memory_space<vmem>>, vector<8x32xf32>,
    %42 = vector.extract_strided_slice %38 {offsets = [0, 32], sizes = [8, 32], strides = [1, 1]} : vector<8x64xf32> to vector<8x32xf32>
    %43 = arith.index_cast %17 : i32 to index
    %c32 = arith.constant 32 : index
    %44 = vector.load %arg8[%43, %c32] : memref<64x64xf32, #tpu.memory_space<vmem>>, vector<8x32xf32>
    tpu.vector_store %arg8[%43, %c32], %42 {strides = array<i32>} : memref<64x64xf32, #tpu.memory_space<vmem>>, vector<8x32xf32>,
    %c1_i32 = arith.constant 1 : i32
    %c8_i32_17 = arith.constant 8 : i32
    %45 = arith.muli %c1_i32, %c8_i32_17 : i32
    %46 = tpu.assume_multiple %45, 8 : i32
    %c7_i32_18 = arith.constant 7 : i32
    %47 = arith.subi %c7_i32_18, %c1_i32 : i32
    %c8_i32_19 = arith.constant 8 : i32
    %48 = arith.muli %47, %c8_i32_19 : i32
    %49 = tpu.assume_multiple %48, 8 : i32
    %50 = arith.index_cast %46 : i32 to index
    %c0_20 = arith.constant 0 : index
    %51 = vector.load %arg6[%50, %c0_20] : memref<64x256xf32, #tpu.memory_space<vmem>>, vector<8x256xf32>
    %52 = arith.truncf %38 : vector<8x64xf32> to vector<8x64xbf16>
    %cst_21 = arith.constant dense<0.000000e+00> : vector<8x256xf32>
    %53 = tpu.matmul %52, %1, %cst_21 {dimension_numbers = #tpu.dot_dimension_numbers<[1], [0], [0], [1], [0, 0, 1, 1], [], []>} : vector<8x64xbf16>, vector<64x256xbf16>, vector<8x256xf32> -> vector<8x256xf32>
    %54 = arith.addf %51, %53 : vector<8x256xf32>
    %55 = vector.extract_strided_slice %54 {offsets = [0, 0], sizes = [8, 192], strides = [1, 1]} : vector<8x256xf32> to vector<8x192xf32>
    %56 = arith.negf %55 : vector<8x192xf32>
    %57 = math.exp %56 : vector<8x192xf32>
    %cst_22 = arith.constant 1.000000e+00 : f32
    %58 = vector.broadcast %cst_22 : f32 to vector<8x192xf32>
    %59 = arith.addf %58, %57 : vector<8x192xf32>
    %60 = arith.divf %58, %59 : vector<8x192xf32>
    %61 = vector.extract_strided_slice %54 {offsets = [0, 192], sizes = [8, 64], strides = [1, 1]} : vector<8x256xf32> to vector<8x64xf32>
    %62 = math.tanh %61 : vector<8x64xf32>
    %63 = vector.extract_strided_slice %60 {offsets = [0, 64], sizes = [8, 64], strides = [1, 1]} : vector<8x192xf32> to vector<8x64xf32>
    %64 = arith.mulf %63, %35 : vector<8x64xf32>
    %65 = vector.extract_strided_slice %60 {offsets = [0, 0], sizes = [8, 64], strides = [1, 1]} : vector<8x192xf32> to vector<8x64xf32>
    %66 = arith.mulf %65, %62 : vector<8x64xf32>
    %67 = arith.addf %64, %66 : vector<8x64xf32>
    %68 = vector.extract_strided_slice %60 {offsets = [0, 128], sizes = [8, 64], strides = [1, 1]} : vector<8x192xf32> to vector<8x64xf32>
    %69 = math.tanh %67 : vector<8x64xf32>
    %70 = arith.mulf %68, %69 : vector<8x64xf32>
    %71 = vector.extract_strided_slice %70 {offsets = [0, 0], sizes = [8, 32], strides = [1, 1]} : vector<8x64xf32> to vector<8x32xf32>
    %72 = arith.index_cast %46 : i32 to index
    %c0_23 = arith.constant 0 : index
    %73 = vector.load %arg8[%72, %c0_23] : memref<64x64xf32, #tpu.memory_space<vmem>>, vector<8x32xf32>
    tpu.vector_store %arg8[%72, %c0_23], %71 {strides = array<i32>} : memref<64x64xf32, #tpu.memory_space<vmem>>, vector<8x32xf32>,
    %74 = vector.extract_strided_slice %70 {offsets = [0, 32], sizes = [8, 32], strides = [1, 1]} : vector<8x64xf32> to vector<8x32xf32>
    %75 = arith.index_cast %49 : i32 to index
    %c32_24 = arith.constant 32 : index
    %76 = vector.load %arg8[%75, %c32_24] : memref<64x64xf32, #tpu.memory_space<vmem>>, vector<8x32xf32>
    tpu.vector_store %arg8[%75, %c32_24], %74 {strides = array<i32>} : memref<64x64xf32, #tpu.memory_space<vmem>>, vector<8x32xf32>,
    %c2_i32 = arith.constant 2 : i32
    %c8_i32_25 = arith.constant 8 : i32
    %77 = arith.muli %c2_i32, %c8_i32_25 : i32
    %78 = tpu.assume_multiple %77, 8 : i32
    %c7_i32_26 = arith.constant 7 : i32
    %79 = arith.subi %c7_i32_26, %c2_i32 : i32
    %c8_i32_27 = arith.constant 8 : i32
    %80 = arith.muli %79, %c8_i32_27 : i32
    %81 = tpu.assume_multiple %80, 8 : i32
    %82 = arith.index_cast %78 : i32 to index
    %c0_28 = arith.constant 0 : index
    %83 = vector.load %arg6[%82, %c0_28] : memref<64x256xf32, #tpu.memory_space<vmem>>, vector<8x256xf32>
    %84 = arith.truncf %70 : vector<8x64xf32> to vector<8x64xbf16>
    %cst_29 = arith.constant dense<0.000000e+00> : vector<8x256xf32>
    %85 = tpu.matmul %84, %1, %cst_29 {dimension_numbers = #tpu.dot_dimension_numbers<[1], [0], [0], [1], [0, 0, 1, 1], [], []>} : vector<8x64xbf16>, vector<64x256xbf16>, vector<8x256xf32> -> vector<8x256xf32>
    %86 = arith.addf %83, %85 : vector<8x256xf32>
    %87 = vector.extract_strided_slice %86 {offsets = [0, 0], sizes = [8, 192], strides = [1, 1]} : vector<8x256xf32> to vector<8x192xf32>
    %88 = arith.negf %87 : vector<8x192xf32>
    %89 = math.exp %88 : vector<8x192xf32>
    %cst_30 = arith.constant 1.000000e+00 : f32
    %90 = vector.broadcast %cst_30 : f32 to vector<8x192xf32>
    %91 = arith.addf %90, %89 : vector<8x192xf32>
    %92 = arith.divf %90, %91 : vector<8x192xf32>
    %93 = vector.extract_strided_slice %86 {offsets = [0, 192], sizes = [8, 64], strides = [1, 1]} : vector<8x256xf32> to vector<8x64xf32>
    %94 = math.tanh %93 : vector<8x64xf32>
    %95 = vector.extract_strided_slice %92 {offsets = [0, 64], sizes = [8, 64], strides = [1, 1]} : vector<8x192xf32> to vector<8x64xf32>
    %96 = arith.mulf %95, %67 : vector<8x64xf32>
    %97 = vector.extract_strided_slice %92 {offsets = [0, 0], sizes = [8, 64], strides = [1, 1]} : vector<8x192xf32> to vector<8x64xf32>
    %98 = arith.mulf %97, %94 : vector<8x64xf32>
    %99 = arith.addf %96, %98 : vector<8x64xf32>
    %100 = vector.extract_strided_slice %92 {offsets = [0, 128], sizes = [8, 64], strides = [1, 1]} : vector<8x192xf32> to vector<8x64xf32>
    %101 = math.tanh %99 : vector<8x64xf32>
    %102 = arith.mulf %100, %101 : vector<8x64xf32>
    %103 = vector.extract_strided_slice %102 {offsets = [0, 0], sizes = [8, 32], strides = [1, 1]} : vector<8x64xf32> to vector<8x32xf32>
    %104 = arith.index_cast %78 : i32 to index
    %c0_31 = arith.constant 0 : index
    %105 = vector.load %arg8[%104, %c0_31] : memref<64x64xf32, #tpu.memory_space<vmem>>, vector<8x32xf32>
    tpu.vector_store %arg8[%104, %c0_31], %103 {strides = array<i32>} : memref<64x64xf32, #tpu.memory_space<vmem>>, vector<8x32xf32>,
    %106 = vector.extract_strided_slice %102 {offsets = [0, 32], sizes = [8, 32], strides = [1, 1]} : vector<8x64xf32> to vector<8x32xf32>
    %107 = arith.index_cast %81 : i32 to index
    %c32_32 = arith.constant 32 : index
    %108 = vector.load %arg8[%107, %c32_32] : memref<64x64xf32, #tpu.memory_space<vmem>>, vector<8x32xf32>
    tpu.vector_store %arg8[%107, %c32_32], %106 {strides = array<i32>} : memref<64x64xf32, #tpu.memory_space<vmem>>, vector<8x32xf32>,
    %c3_i32 = arith.constant 3 : i32
    %c8_i32_33 = arith.constant 8 : i32
    %109 = arith.muli %c3_i32, %c8_i32_33 : i32
    %110 = tpu.assume_multiple %109, 8 : i32
    %c7_i32_34 = arith.constant 7 : i32
    %111 = arith.subi %c7_i32_34, %c3_i32 : i32
    %c8_i32_35 = arith.constant 8 : i32
    %112 = arith.muli %111, %c8_i32_35 : i32
    %113 = tpu.assume_multiple %112, 8 : i32
    %114 = arith.index_cast %110 : i32 to index
    %c0_36 = arith.constant 0 : index
    %115 = vector.load %arg6[%114, %c0_36] : memref<64x256xf32, #tpu.memory_space<vmem>>, vector<8x256xf32>
    %116 = arith.truncf %102 : vector<8x64xf32> to vector<8x64xbf16>
    %cst_37 = arith.constant dense<0.000000e+00> : vector<8x256xf32>
    %117 = tpu.matmul %116, %1, %cst_37 {dimension_numbers = #tpu.dot_dimension_numbers<[1], [0], [0], [1], [0, 0, 1, 1], [], []>} : vector<8x64xbf16>, vector<64x256xbf16>, vector<8x256xf32> -> vector<8x256xf32>
    %118 = arith.addf %115, %117 : vector<8x256xf32>
    %119 = vector.extract_strided_slice %118 {offsets = [0, 0], sizes = [8, 192], strides = [1, 1]} : vector<8x256xf32> to vector<8x192xf32>
    %120 = arith.negf %119 : vector<8x192xf32>
    %121 = math.exp %120 : vector<8x192xf32>
    %cst_38 = arith.constant 1.000000e+00 : f32
    %122 = vector.broadcast %cst_38 : f32 to vector<8x192xf32>
    %123 = arith.addf %122, %121 : vector<8x192xf32>
    %124 = arith.divf %122, %123 : vector<8x192xf32>
    %125 = vector.extract_strided_slice %118 {offsets = [0, 192], sizes = [8, 64], strides = [1, 1]} : vector<8x256xf32> to vector<8x64xf32>
    %126 = math.tanh %125 : vector<8x64xf32>
    %127 = vector.extract_strided_slice %124 {offsets = [0, 64], sizes = [8, 64], strides = [1, 1]} : vector<8x192xf32> to vector<8x64xf32>
    %128 = arith.mulf %127, %99 : vector<8x64xf32>
    %129 = vector.extract_strided_slice %124 {offsets = [0, 0], sizes = [8, 64], strides = [1, 1]} : vector<8x192xf32> to vector<8x64xf32>
    %130 = arith.mulf %129, %126 : vector<8x64xf32>
    %131 = arith.addf %128, %130 : vector<8x64xf32>
    %132 = vector.extract_strided_slice %124 {offsets = [0, 128], sizes = [8, 64], strides = [1, 1]} : vector<8x192xf32> to vector<8x64xf32>
    %133 = math.tanh %131 : vector<8x64xf32>
    %134 = arith.mulf %132, %133 : vector<8x64xf32>
    %135 = vector.extract_strided_slice %134 {offsets = [0, 0], sizes = [8, 32], strides = [1, 1]} : vector<8x64xf32> to vector<8x32xf32>
    %136 = arith.index_cast %110 : i32 to index
    %c0_39 = arith.constant 0 : index
    %137 = vector.load %arg8[%136, %c0_39] : memref<64x64xf32, #tpu.memory_space<vmem>>, vector<8x32xf32>
    tpu.vector_store %arg8[%136, %c0_39], %135 {strides = array<i32>} : memref<64x64xf32, #tpu.memory_space<vmem>>, vector<8x32xf32>,
    %138 = vector.extract_strided_slice %134 {offsets = [0, 32], sizes = [8, 32], strides = [1, 1]} : vector<8x64xf32> to vector<8x32xf32>
    %139 = arith.index_cast %113 : i32 to index
    %c32_40 = arith.constant 32 : index
    %140 = vector.load %arg8[%139, %c32_40] : memref<64x64xf32, #tpu.memory_space<vmem>>, vector<8x32xf32>
    tpu.vector_store %arg8[%139, %c32_40], %138 {strides = array<i32>} : memref<64x64xf32, #tpu.memory_space<vmem>>, vector<8x32xf32>,
    %c4_i32 = arith.constant 4 : i32
    %c8_i32_41 = arith.constant 8 : i32
    %141 = arith.muli %c4_i32, %c8_i32_41 : i32
    %142 = tpu.assume_multiple %141, 8 : i32
    %c7_i32_42 = arith.constant 7 : i32
    %143 = arith.subi %c7_i32_42, %c4_i32 : i32
    %c8_i32_43 = arith.constant 8 : i32
    %144 = arith.muli %143, %c8_i32_43 : i32
    %145 = tpu.assume_multiple %144, 8 : i32
    %146 = arith.index_cast %142 : i32 to index
    %c0_44 = arith.constant 0 : index
    %147 = vector.load %arg6[%146, %c0_44] : memref<64x256xf32, #tpu.memory_space<vmem>>, vector<8x256xf32>
    %148 = arith.truncf %134 : vector<8x64xf32> to vector<8x64xbf16>
    %cst_45 = arith.constant dense<0.000000e+00> : vector<8x256xf32>
    %149 = tpu.matmul %148, %1, %cst_45 {dimension_numbers = #tpu.dot_dimension_numbers<[1], [0], [0], [1], [0, 0, 1, 1], [], []>} : vector<8x64xbf16>, vector<64x256xbf16>, vector<8x256xf32> -> vector<8x256xf32>
    %150 = arith.addf %147, %149 : vector<8x256xf32>
    %151 = vector.extract_strided_slice %150 {offsets = [0, 0], sizes = [8, 192], strides = [1, 1]} : vector<8x256xf32> to vector<8x192xf32>
    %152 = arith.negf %151 : vector<8x192xf32>
    %153 = math.exp %152 : vector<8x192xf32>
    %cst_46 = arith.constant 1.000000e+00 : f32
    %154 = vector.broadcast %cst_46 : f32 to vector<8x192xf32>
    %155 = arith.addf %154, %153 : vector<8x192xf32>
    %156 = arith.divf %154, %155 : vector<8x192xf32>
    %157 = vector.extract_strided_slice %150 {offsets = [0, 192], sizes = [8, 64], strides = [1, 1]} : vector<8x256xf32> to vector<8x64xf32>
    %158 = math.tanh %157 : vector<8x64xf32>
    %159 = vector.extract_strided_slice %156 {offsets = [0, 64], sizes = [8, 64], strides = [1, 1]} : vector<8x192xf32> to vector<8x64xf32>
    %160 = arith.mulf %159, %131 : vector<8x64xf32>
    %161 = vector.extract_strided_slice %156 {offsets = [0, 0], sizes = [8, 64], strides = [1, 1]} : vector<8x192xf32> to vector<8x64xf32>
    %162 = arith.mulf %161, %158 : vector<8x64xf32>
    %163 = arith.addf %160, %162 : vector<8x64xf32>
    %164 = vector.extract_strided_slice %156 {offsets = [0, 128], sizes = [8, 64], strides = [1, 1]} : vector<8x192xf32> to vector<8x64xf32>
    %165 = math.tanh %163 : vector<8x64xf32>
    %166 = arith.mulf %164, %165 : vector<8x64xf32>
    %167 = vector.extract_strided_slice %166 {offsets = [0, 0], sizes = [8, 32], strides = [1, 1]} : vector<8x64xf32> to vector<8x32xf32>
    %168 = arith.index_cast %142 : i32 to index
    %c0_47 = arith.constant 0 : index
    %169 = vector.load %arg8[%168, %c0_47] : memref<64x64xf32, #tpu.memory_space<vmem>>, vector<8x32xf32>
    tpu.vector_store %arg8[%168, %c0_47], %167 {strides = array<i32>} : memref<64x64xf32, #tpu.memory_space<vmem>>, vector<8x32xf32>,
    %170 = vector.extract_strided_slice %166 {offsets = [0, 32], sizes = [8, 32], strides = [1, 1]} : vector<8x64xf32> to vector<8x32xf32>
    %171 = arith.index_cast %145 : i32 to index
    %c32_48 = arith.constant 32 : index
    %172 = vector.load %arg8[%171, %c32_48] : memref<64x64xf32, #tpu.memory_space<vmem>>, vector<8x32xf32>
    tpu.vector_store %arg8[%171, %c32_48], %170 {strides = array<i32>} : memref<64x64xf32, #tpu.memory_space<vmem>>, vector<8x32xf32>,
    %c5_i32 = arith.constant 5 : i32
    %c8_i32_49 = arith.constant 8 : i32
    %173 = arith.muli %c5_i32, %c8_i32_49 : i32
    %174 = tpu.assume_multiple %173, 8 : i32
    %c7_i32_50 = arith.constant 7 : i32
    %175 = arith.subi %c7_i32_50, %c5_i32 : i32
    %c8_i32_51 = arith.constant 8 : i32
    %176 = arith.muli %175, %c8_i32_51 : i32
    %177 = tpu.assume_multiple %176, 8 : i32
    %178 = arith.index_cast %174 : i32 to index
    %c0_52 = arith.constant 0 : index
    %179 = vector.load %arg6[%178, %c0_52] : memref<64x256xf32, #tpu.memory_space<vmem>>, vector<8x256xf32>
    %180 = arith.truncf %166 : vector<8x64xf32> to vector<8x64xbf16>
    %cst_53 = arith.constant dense<0.000000e+00> : vector<8x256xf32>
    %181 = tpu.matmul %180, %1, %cst_53 {dimension_numbers = #tpu.dot_dimension_numbers<[1], [0], [0], [1], [0, 0, 1, 1], [], []>} : vector<8x64xbf16>, vector<64x256xbf16>, vector<8x256xf32> -> vector<8x256xf32>
    %182 = arith.addf %179, %181 : vector<8x256xf32>
    %183 = vector.extract_strided_slice %182 {offsets = [0, 0], sizes = [8, 192], strides = [1, 1]} : vector<8x256xf32> to vector<8x192xf32>
    %184 = arith.negf %183 : vector<8x192xf32>
    %185 = math.exp %184 : vector<8x192xf32>
    %cst_54 = arith.constant 1.000000e+00 : f32
    %186 = vector.broadcast %cst_54 : f32 to vector<8x192xf32>
    %187 = arith.addf %186, %185 : vector<8x192xf32>
    %188 = arith.divf %186, %187 : vector<8x192xf32>
    %189 = vector.extract_strided_slice %182 {offsets = [0, 192], sizes = [8, 64], strides = [1, 1]} : vector<8x256xf32> to vector<8x64xf32>
    %190 = math.tanh %189 : vector<8x64xf32>
    %191 = vector.extract_strided_slice %188 {offsets = [0, 64], sizes = [8, 64], strides = [1, 1]} : vector<8x192xf32> to vector<8x64xf32>
    %192 = arith.mulf %191, %163 : vector<8x64xf32>
    %193 = vector.extract_strided_slice %188 {offsets = [0, 0], sizes = [8, 64], strides = [1, 1]} : vector<8x192xf32> to vector<8x64xf32>
    %194 = arith.mulf %193, %190 : vector<8x64xf32>
    %195 = arith.addf %192, %194 : vector<8x64xf32>
    %196 = vector.extract_strided_slice %188 {offsets = [0, 128], sizes = [8, 64], strides = [1, 1]} : vector<8x192xf32> to vector<8x64xf32>
    %197 = math.tanh %195 : vector<8x64xf32>
    %198 = arith.mulf %196, %197 : vector<8x64xf32>
    %199 = vector.extract_strided_slice %198 {offsets = [0, 0], sizes = [8, 32], strides = [1, 1]} : vector<8x64xf32> to vector<8x32xf32>
    %200 = arith.index_cast %174 : i32 to index
    %c0_55 = arith.constant 0 : index
    %201 = vector.load %arg8[%200, %c0_55] : memref<64x64xf32, #tpu.memory_space<vmem>>, vector<8x32xf32>
    tpu.vector_store %arg8[%200, %c0_55], %199 {strides = array<i32>} : memref<64x64xf32, #tpu.memory_space<vmem>>, vector<8x32xf32>,
    %202 = vector.extract_strided_slice %198 {offsets = [0, 32], sizes = [8, 32], strides = [1, 1]} : vector<8x64xf32> to vector<8x32xf32>
    %203 = arith.index_cast %177 : i32 to index
    %c32_56 = arith.constant 32 : index
    %204 = vector.load %arg8[%203, %c32_56] : memref<64x64xf32, #tpu.memory_space<vmem>>, vector<8x32xf32>
    tpu.vector_store %arg8[%203, %c32_56], %202 {strides = array<i32>} : memref<64x64xf32, #tpu.memory_space<vmem>>, vector<8x32xf32>,
    %c6_i32 = arith.constant 6 : i32
    %c8_i32_57 = arith.constant 8 : i32
    %205 = arith.muli %c6_i32, %c8_i32_57 : i32
    %206 = tpu.assume_multiple %205, 8 : i32
    %c7_i32_58 = arith.constant 7 : i32
    %207 = arith.subi %c7_i32_58, %c6_i32 : i32
    %c8_i32_59 = arith.constant 8 : i32
    %208 = arith.muli %207, %c8_i32_59 : i32
    %209 = tpu.assume_multiple %208, 8 : i32
    %210 = arith.index_cast %206 : i32 to index
    %c0_60 = arith.constant 0 : index
    %211 = vector.load %arg6[%210, %c0_60] : memref<64x256xf32, #tpu.memory_space<vmem>>, vector<8x256xf32>
    %212 = arith.truncf %198 : vector<8x64xf32> to vector<8x64xbf16>
    %cst_61 = arith.constant dense<0.000000e+00> : vector<8x256xf32>
    %213 = tpu.matmul %212, %1, %cst_61 {dimension_numbers = #tpu.dot_dimension_numbers<[1], [0], [0], [1], [0, 0, 1, 1], [], []>} : vector<8x64xbf16>, vector<64x256xbf16>, vector<8x256xf32> -> vector<8x256xf32>
    %214 = arith.addf %211, %213 : vector<8x256xf32>
    %215 = vector.extract_strided_slice %214 {offsets = [0, 0], sizes = [8, 192], strides = [1, 1]} : vector<8x256xf32> to vector<8x192xf32>
    %216 = arith.negf %215 : vector<8x192xf32>
    %217 = math.exp %216 : vector<8x192xf32>
    %cst_62 = arith.constant 1.000000e+00 : f32
    %218 = vector.broadcast %cst_62 : f32 to vector<8x192xf32>
    %219 = arith.addf %218, %217 : vector<8x192xf32>
    %220 = arith.divf %218, %219 : vector<8x192xf32>
    %221 = vector.extract_strided_slice %214 {offsets = [0, 192], sizes = [8, 64], strides = [1, 1]} : vector<8x256xf32> to vector<8x64xf32>
    %222 = math.tanh %221 : vector<8x64xf32>
    %223 = vector.extract_strided_slice %220 {offsets = [0, 64], sizes = [8, 64], strides = [1, 1]} : vector<8x192xf32> to vector<8x64xf32>
    %224 = arith.mulf %223, %195 : vector<8x64xf32>
    %225 = vector.extract_strided_slice %220 {offsets = [0, 0], sizes = [8, 64], strides = [1, 1]} : vector<8x192xf32> to vector<8x64xf32>
    %226 = arith.mulf %225, %222 : vector<8x64xf32>
    %227 = arith.addf %224, %226 : vector<8x64xf32>
    %228 = vector.extract_strided_slice %220 {offsets = [0, 128], sizes = [8, 64], strides = [1, 1]} : vector<8x192xf32> to vector<8x64xf32>
    %229 = math.tanh %227 : vector<8x64xf32>
    %230 = arith.mulf %228, %229 : vector<8x64xf32>
    %231 = vector.extract_strided_slice %230 {offsets = [0, 0], sizes = [8, 32], strides = [1, 1]} : vector<8x64xf32> to vector<8x32xf32>
    %232 = arith.index_cast %206 : i32 to index
    %c0_63 = arith.constant 0 : index
    %233 = vector.load %arg8[%232, %c0_63] : memref<64x64xf32, #tpu.memory_space<vmem>>, vector<8x32xf32>
    tpu.vector_store %arg8[%232, %c0_63], %231 {strides = array<i32>} : memref<64x64xf32, #tpu.memory_space<vmem>>, vector<8x32xf32>,
    %234 = vector.extract_strided_slice %230 {offsets = [0, 32], sizes = [8, 32], strides = [1, 1]} : vector<8x64xf32> to vector<8x32xf32>
    %235 = arith.index_cast %209 : i32 to index
    %c32_64 = arith.constant 32 : index
    %236 = vector.load %arg8[%235, %c32_64] : memref<64x64xf32, #tpu.memory_space<vmem>>, vector<8x32xf32>
    tpu.vector_store %arg8[%235, %c32_64], %234 {strides = array<i32>} : memref<64x64xf32, #tpu.memory_space<vmem>>, vector<8x32xf32>,
    %c7_i32_65 = arith.constant 7 : i32
    %c8_i32_66 = arith.constant 8 : i32
    %237 = arith.muli %c7_i32_65, %c8_i32_66 : i32
    %238 = tpu.assume_multiple %237, 8 : i32
    %c7_i32_67 = arith.constant 7 : i32
    %239 = arith.subi %c7_i32_67, %c7_i32_65 : i32
    %c8_i32_68 = arith.constant 8 : i32
    %240 = arith.muli %239, %c8_i32_68 : i32
    %241 = tpu.assume_multiple %240, 8 : i32
    %242 = arith.index_cast %238 : i32 to index
    %c0_69 = arith.constant 0 : index
    %243 = vector.load %arg6[%242, %c0_69] : memref<64x256xf32, #tpu.memory_space<vmem>>, vector<8x256xf32>
    %244 = arith.truncf %230 : vector<8x64xf32> to vector<8x64xbf16>
    %cst_70 = arith.constant dense<0.000000e+00> : vector<8x256xf32>
    %245 = tpu.matmul %244, %1, %cst_70 {dimension_numbers = #tpu.dot_dimension_numbers<[1], [0], [0], [1], [0, 0, 1, 1], [], []>} : vector<8x64xbf16>, vector<64x256xbf16>, vector<8x256xf32> -> vector<8x256xf32>
    %246 = arith.addf %243, %245 : vector<8x256xf32>
    %247 = vector.extract_strided_slice %246 {offsets = [0, 0], sizes = [8, 192], strides = [1, 1]} : vector<8x256xf32> to vector<8x192xf32>
    %248 = arith.negf %247 : vector<8x192xf32>
    %249 = math.exp %248 : vector<8x192xf32>
    %cst_71 = arith.constant 1.000000e+00 : f32
    %250 = vector.broadcast %cst_71 : f32 to vector<8x192xf32>
    %251 = arith.addf %250, %249 : vector<8x192xf32>
    %252 = arith.divf %250, %251 : vector<8x192xf32>
    %253 = vector.extract_strided_slice %246 {offsets = [0, 192], sizes = [8, 64], strides = [1, 1]} : vector<8x256xf32> to vector<8x64xf32>
    %254 = math.tanh %253 : vector<8x64xf32>
    %255 = vector.extract_strided_slice %252 {offsets = [0, 64], sizes = [8, 64], strides = [1, 1]} : vector<8x192xf32> to vector<8x64xf32>
    %256 = arith.mulf %255, %227 : vector<8x64xf32>
    %257 = vector.extract_strided_slice %252 {offsets = [0, 0], sizes = [8, 64], strides = [1, 1]} : vector<8x192xf32> to vector<8x64xf32>
    %258 = arith.mulf %257, %254 : vector<8x64xf32>
    %259 = arith.addf %256, %258 : vector<8x64xf32>
    %260 = vector.extract_strided_slice %252 {offsets = [0, 128], sizes = [8, 64], strides = [1, 1]} : vector<8x192xf32> to vector<8x64xf32>
    %261 = math.tanh %259 : vector<8x64xf32>
    %262 = arith.mulf %260, %261 : vector<8x64xf32>
    %263 = vector.extract_strided_slice %262 {offsets = [0, 0], sizes = [8, 32], strides = [1, 1]} : vector<8x64xf32> to vector<8x32xf32>
    %264 = arith.index_cast %238 : i32 to index
    %c0_72 = arith.constant 0 : index
    %265 = vector.load %arg8[%264, %c0_72] : memref<64x64xf32, #tpu.memory_space<vmem>>, vector<8x32xf32>
    tpu.vector_store %arg8[%264, %c0_72], %263 {strides = array<i32>} : memref<64x64xf32, #tpu.memory_space<vmem>>, vector<8x32xf32>,
    %266 = vector.extract_strided_slice %262 {offsets = [0, 32], sizes = [8, 32], strides = [1, 1]} : vector<8x64xf32> to vector<8x32xf32>
    %267 = arith.index_cast %241 : i32 to index
    %c32_73 = arith.constant 32 : index
    %268 = vector.load %arg8[%267, %c32_73] : memref<64x64xf32, #tpu.memory_space<vmem>>, vector<8x32xf32>
    tpu.vector_store %arg8[%267, %c32_73], %266 {strides = array<i32>} : memref<64x64xf32, #tpu.memory_space<vmem>>, vector<8x32xf32>,
    %c8_i32_74 = arith.constant 8 : i32
    %c0_75 = arith.constant 0 : index
    %c0_76 = arith.constant 0 : index
    %269 = vector.load %arg8[%c0_75, %c0_76] : memref<64x64xf32, #tpu.memory_space<vmem>>, vector<64x64xf32>
    %270 = arith.truncf %269 : vector<64x64xf32> to vector<64x64xbf16>
    %cst_77 = arith.constant dense<0.000000e+00> : vector<64x256xf32>
    %271 = tpu.matmul %270, %2, %cst_77 {dimension_numbers = #tpu.dot_dimension_numbers<[1], [0], [0], [1], [0, 0, 1, 1], [], []>} : vector<64x64xbf16>, vector<64x256xbf16>, vector<64x256xf32> -> vector<64x256xf32>
    %272 = vector.broadcast %6 : vector<1x256xf32> to vector<64x256xf32>
    %273 = arith.addf %271, %272 : vector<64x256xf32>
    %c0_78 = arith.constant 0 : index
    %c0_79 = arith.constant 0 : index
    %274 = vector.load %arg7[%c0_78, %c0_79] : memref<64x256xf32, #tpu.memory_space<vmem>>, vector<64x256xf32>
    tpu.vector_store %arg7[%c0_78, %c0_79], %273 {strides = array<i32>} : memref<64x256xf32, #tpu.memory_space<vmem>>, vector<64x256xf32>,
    %cst_80 = arith.constant 0.000000e+00 : f32
    %275 = vector.broadcast %cst_80 : f32 to vector<8x32xf32>
    %c0_i32_81 = arith.constant 0 : i32
    %c8_i32_82 = arith.constant 8 : i32
    %276 = arith.muli %c0_i32_81, %c8_i32_82 : i32
    %277 = tpu.assume_multiple %276, 8 : i32
    %278 = arith.index_cast %277 : i32 to index
    %c0_83 = arith.constant 0 : index
    %279 = vector.load %arg7[%278, %c0_83] : memref<64x256xf32, #tpu.memory_space<vmem>>, vector<8x256xf32>
    %280 = vector.extract_strided_slice %279 {offsets = [0, 0], sizes = [8, 128], strides = [1, 1]} : vector<8x256xf32> to vector<8x128xf32>
    %281 = arith.truncf %275 : vector<8x32xf32> to vector<8x32xbf16>
    %cst_84 = arith.constant dense<0.000000e+00> : vector<8x128xf32>
    %282 = tpu.matmul %281, %4, %cst_84 {dimension_numbers = #tpu.dot_dimension_numbers<[1], [0], [0], [1], [0, 0, 1, 1], [], []>} : vector<8x32xbf16>, vector<32x128xbf16>, vector<8x128xf32> -> vector<8x128xf32>
    %283 = arith.addf %280, %282 : vector<8x128xf32>
    %284 = vector.extract_strided_slice %283 {offsets = [0, 0], sizes = [8, 96], strides = [1, 1]} : vector<8x128xf32> to vector<8x96xf32>
    %285 = arith.negf %284 : vector<8x96xf32>
    %286 = math.exp %285 : vector<8x96xf32>
    %cst_85 = arith.constant 1.000000e+00 : f32
    %287 = vector.broadcast %cst_85 : f32 to vector<8x96xf32>
    %288 = arith.addf %287, %286 : vector<8x96xf32>
    %289 = arith.divf %287, %288 : vector<8x96xf32>
    %290 = vector.extract_strided_slice %283 {offsets = [0, 96], sizes = [8, 32], strides = [1, 1]} : vector<8x128xf32> to vector<8x32xf32>
    %291 = math.tanh %290 : vector<8x32xf32>
    %292 = vector.extract_strided_slice %289 {offsets = [0, 32], sizes = [8, 32], strides = [1, 1]} : vector<8x96xf32> to vector<8x32xf32>
    %293 = arith.mulf %292, %275 : vector<8x32xf32>
    %294 = vector.extract_strided_slice %289 {offsets = [0, 0], sizes = [8, 32], strides = [1, 1]} : vector<8x96xf32> to vector<8x32xf32>
    %295 = arith.mulf %294, %291 : vector<8x32xf32>
    %296 = arith.addf %293, %295 : vector<8x32xf32>
    %297 = vector.extract_strided_slice %289 {offsets = [0, 64], sizes = [8, 32], strides = [1, 1]} : vector<8x96xf32> to vector<8x32xf32>
    %298 = math.tanh %296 : vector<8x32xf32>
    %299 = arith.mulf %297, %298 : vector<8x32xf32>
    %c1_i32_86 = arith.constant 1 : i32
    %c8_i32_87 = arith.constant 8 : i32
    %300 = arith.muli %c1_i32_86, %c8_i32_87 : i32
    %301 = tpu.assume_multiple %300, 8 : i32
    %302 = arith.index_cast %301 : i32 to index
    %c0_88 = arith.constant 0 : index
    %303 = vector.load %arg7[%302, %c0_88] : memref<64x256xf32, #tpu.memory_space<vmem>>, vector<8x256xf32>
    %304 = vector.extract_strided_slice %303 {offsets = [0, 0], sizes = [8, 128], strides = [1, 1]} : vector<8x256xf32> to vector<8x128xf32>
    %305 = arith.truncf %299 : vector<8x32xf32> to vector<8x32xbf16>
    %cst_89 = arith.constant dense<0.000000e+00> : vector<8x128xf32>
    %306 = tpu.matmul %305, %4, %cst_89 {dimension_numbers = #tpu.dot_dimension_numbers<[1], [0], [0], [1], [0, 0, 1, 1], [], []>} : vector<8x32xbf16>, vector<32x128xbf16>, vector<8x128xf32> -> vector<8x128xf32>
    %307 = arith.addf %304, %306 : vector<8x128xf32>
    %308 = vector.extract_strided_slice %307 {offsets = [0, 0], sizes = [8, 96], strides = [1, 1]} : vector<8x128xf32> to vector<8x96xf32>
    %309 = arith.negf %308 : vector<8x96xf32>
    %310 = math.exp %309 : vector<8x96xf32>
    %cst_90 = arith.constant 1.000000e+00 : f32
    %311 = vector.broadcast %cst_90 : f32 to vector<8x96xf32>
    %312 = arith.addf %311, %310 : vector<8x96xf32>
    %313 = arith.divf %311, %312 : vector<8x96xf32>
    %314 = vector.extract_strided_slice %307 {offsets = [0, 96], sizes = [8, 32], strides = [1, 1]} : vector<8x128xf32> to vector<8x32xf32>
    %315 = math.tanh %314 : vector<8x32xf32>
    %316 = vector.extract_strided_slice %313 {offsets = [0, 32], sizes = [8, 32], strides = [1, 1]} : vector<8x96xf32> to vector<8x32xf32>
    %317 = arith.mulf %316, %296 : vector<8x32xf32>
    %318 = vector.extract_strided_slice %313 {offsets = [0, 0], sizes = [8, 32], strides = [1, 1]} : vector<8x96xf32> to vector<8x32xf32>
    %319 = arith.mulf %318, %315 : vector<8x32xf32>
    %320 = arith.addf %317, %319 : vector<8x32xf32>
    %321 = vector.extract_strided_slice %313 {offsets = [0, 64], sizes = [8, 32], strides = [1, 1]} : vector<8x96xf32> to vector<8x32xf32>
    %322 = math.tanh %320 : vector<8x32xf32>
    %323 = arith.mulf %321, %322 : vector<8x32xf32>
    %c2_i32_91 = arith.constant 2 : i32
    %c8_i32_92 = arith.constant 8 : i32
    %324 = arith.muli %c2_i32_91, %c8_i32_92 : i32
    %325 = tpu.assume_multiple %324, 8 : i32
    %326 = arith.index_cast %325 : i32 to index
    %c0_93 = arith.constant 0 : index
    %327 = vector.load %arg7[%326, %c0_93] : memref<64x256xf32, #tpu.memory_space<vmem>>, vector<8x256xf32>
    %328 = vector.extract_strided_slice %327 {offsets = [0, 0], sizes = [8, 128], strides = [1, 1]} : vector<8x256xf32> to vector<8x128xf32>
    %329 = arith.truncf %323 : vector<8x32xf32> to vector<8x32xbf16>
    %cst_94 = arith.constant dense<0.000000e+00> : vector<8x128xf32>
    %330 = tpu.matmul %329, %4, %cst_94 {dimension_numbers = #tpu.dot_dimension_numbers<[1], [0], [0], [1], [0, 0, 1, 1], [], []>} : vector<8x32xbf16>, vector<32x128xbf16>, vector<8x128xf32> -> vector<8x128xf32>
    %331 = arith.addf %328, %330 : vector<8x128xf32>
    %332 = vector.extract_strided_slice %331 {offsets = [0, 0], sizes = [8, 96], strides = [1, 1]} : vector<8x128xf32> to vector<8x96xf32>
    %333 = arith.negf %332 : vector<8x96xf32>
    %334 = math.exp %333 : vector<8x96xf32>
    %cst_95 = arith.constant 1.000000e+00 : f32
    %335 = vector.broadcast %cst_95 : f32 to vector<8x96xf32>
    %336 = arith.addf %335, %334 : vector<8x96xf32>
    %337 = arith.divf %335, %336 : vector<8x96xf32>
    %338 = vector.extract_strided_slice %331 {offsets = [0, 96], sizes = [8, 32], strides = [1, 1]} : vector<8x128xf32> to vector<8x32xf32>
    %339 = math.tanh %338 : vector<8x32xf32>
    %340 = vector.extract_strided_slice %337 {offsets = [0, 32], sizes = [8, 32], strides = [1, 1]} : vector<8x96xf32> to vector<8x32xf32>
    %341 = arith.mulf %340, %320 : vector<8x32xf32>
    %342 = vector.extract_strided_slice %337 {offsets = [0, 0], sizes = [8, 32], strides = [1, 1]} : vector<8x96xf32> to vector<8x32xf32>
    %343 = arith.mulf %342, %339 : vector<8x32xf32>
    %344 = arith.addf %341, %343 : vector<8x32xf32>
    %345 = vector.extract_strided_slice %337 {offsets = [0, 64], sizes = [8, 32], strides = [1, 1]} : vector<8x96xf32> to vector<8x32xf32>
    %346 = math.tanh %344 : vector<8x32xf32>
    %347 = arith.mulf %345, %346 : vector<8x32xf32>
    %c3_i32_96 = arith.constant 3 : i32
    %c8_i32_97 = arith.constant 8 : i32
    %348 = arith.muli %c3_i32_96, %c8_i32_97 : i32
    %349 = tpu.assume_multiple %348, 8 : i32
    %350 = arith.index_cast %349 : i32 to index
    %c0_98 = arith.constant 0 : index
    %351 = vector.load %arg7[%350, %c0_98] : memref<64x256xf32, #tpu.memory_space<vmem>>, vector<8x256xf32>
    %352 = vector.extract_strided_slice %351 {offsets = [0, 0], sizes = [8, 128], strides = [1, 1]} : vector<8x256xf32> to vector<8x128xf32>
    %353 = arith.truncf %347 : vector<8x32xf32> to vector<8x32xbf16>
    %cst_99 = arith.constant dense<0.000000e+00> : vector<8x128xf32>
    %354 = tpu.matmul %353, %4, %cst_99 {dimension_numbers = #tpu.dot_dimension_numbers<[1], [0], [0], [1], [0, 0, 1, 1], [], []>} : vector<8x32xbf16>, vector<32x128xbf16>, vector<8x128xf32> -> vector<8x128xf32>
    %355 = arith.addf %352, %354 : vector<8x128xf32>
    %356 = vector.extract_strided_slice %355 {offsets = [0, 0], sizes = [8, 96], strides = [1, 1]} : vector<8x128xf32> to vector<8x96xf32>
    %357 = arith.negf %356 : vector<8x96xf32>
    %358 = math.exp %357 : vector<8x96xf32>
    %cst_100 = arith.constant 1.000000e+00 : f32
    %359 = vector.broadcast %cst_100 : f32 to vector<8x96xf32>
    %360 = arith.addf %359, %358 : vector<8x96xf32>
    %361 = arith.divf %359, %360 : vector<8x96xf32>
    %362 = vector.extract_strided_slice %355 {offsets = [0, 96], sizes = [8, 32], strides = [1, 1]} : vector<8x128xf32> to vector<8x32xf32>
    %363 = math.tanh %362 : vector<8x32xf32>
    %364 = vector.extract_strided_slice %361 {offsets = [0, 32], sizes = [8, 32], strides = [1, 1]} : vector<8x96xf32> to vector<8x32xf32>
    %365 = arith.mulf %364, %344 : vector<8x32xf32>
    %366 = vector.extract_strided_slice %361 {offsets = [0, 0], sizes = [8, 32], strides = [1, 1]} : vector<8x96xf32> to vector<8x32xf32>
    %367 = arith.mulf %366, %363 : vector<8x32xf32>
    %368 = arith.addf %365, %367 : vector<8x32xf32>
    %369 = vector.extract_strided_slice %361 {offsets = [0, 64], sizes = [8, 32], strides = [1, 1]} : vector<8x96xf32> to vector<8x32xf32>
    %370 = math.tanh %368 : vector<8x32xf32>
    %371 = arith.mulf %369, %370 : vector<8x32xf32>
    %c4_i32_101 = arith.constant 4 : i32
    %c8_i32_102 = arith.constant 8 : i32
    %372 = arith.muli %c4_i32_101, %c8_i32_102 : i32
    %373 = tpu.assume_multiple %372, 8 : i32
    %374 = arith.index_cast %373 : i32 to index
    %c0_103 = arith.constant 0 : index
    %375 = vector.load %arg7[%374, %c0_103] : memref<64x256xf32, #tpu.memory_space<vmem>>, vector<8x256xf32>
    %376 = vector.extract_strided_slice %375 {offsets = [0, 0], sizes = [8, 128], strides = [1, 1]} : vector<8x256xf32> to vector<8x128xf32>
    %377 = arith.truncf %371 : vector<8x32xf32> to vector<8x32xbf16>
    %cst_104 = arith.constant dense<0.000000e+00> : vector<8x128xf32>
    %378 = tpu.matmul %377, %4, %cst_104 {dimension_numbers = #tpu.dot_dimension_numbers<[1], [0], [0], [1], [0, 0, 1, 1], [], []>} : vector<8x32xbf16>, vector<32x128xbf16>, vector<8x128xf32> -> vector<8x128xf32>
    %379 = arith.addf %376, %378 : vector<8x128xf32>
    %380 = vector.extract_strided_slice %379 {offsets = [0, 0], sizes = [8, 96], strides = [1, 1]} : vector<8x128xf32> to vector<8x96xf32>
    %381 = arith.negf %380 : vector<8x96xf32>
    %382 = math.exp %381 : vector<8x96xf32>
    %cst_105 = arith.constant 1.000000e+00 : f32
    %383 = vector.broadcast %cst_105 : f32 to vector<8x96xf32>
    %384 = arith.addf %383, %382 : vector<8x96xf32>
    %385 = arith.divf %383, %384 : vector<8x96xf32>
    %386 = vector.extract_strided_slice %379 {offsets = [0, 96], sizes = [8, 32], strides = [1, 1]} : vector<8x128xf32> to vector<8x32xf32>
    %387 = math.tanh %386 : vector<8x32xf32>
    %388 = vector.extract_strided_slice %385 {offsets = [0, 32], sizes = [8, 32], strides = [1, 1]} : vector<8x96xf32> to vector<8x32xf32>
    %389 = arith.mulf %388, %368 : vector<8x32xf32>
    %390 = vector.extract_strided_slice %385 {offsets = [0, 0], sizes = [8, 32], strides = [1, 1]} : vector<8x96xf32> to vector<8x32xf32>
    %391 = arith.mulf %390, %387 : vector<8x32xf32>
    %392 = arith.addf %389, %391 : vector<8x32xf32>
    %393 = vector.extract_strided_slice %385 {offsets = [0, 64], sizes = [8, 32], strides = [1, 1]} : vector<8x96xf32> to vector<8x32xf32>
    %394 = math.tanh %392 : vector<8x32xf32>
    %395 = arith.mulf %393, %394 : vector<8x32xf32>
    %c5_i32_106 = arith.constant 5 : i32
    %c8_i32_107 = arith.constant 8 : i32
    %396 = arith.muli %c5_i32_106, %c8_i32_107 : i32
    %397 = tpu.assume_multiple %396, 8 : i32
    %398 = arith.index_cast %397 : i32 to index
    %c0_108 = arith.constant 0 : index
    %399 = vector.load %arg7[%398, %c0_108] : memref<64x256xf32, #tpu.memory_space<vmem>>, vector<8x256xf32>
    %400 = vector.extract_strided_slice %399 {offsets = [0, 0], sizes = [8, 128], strides = [1, 1]} : vector<8x256xf32> to vector<8x128xf32>
    %401 = arith.truncf %395 : vector<8x32xf32> to vector<8x32xbf16>
    %cst_109 = arith.constant dense<0.000000e+00> : vector<8x128xf32>
    %402 = tpu.matmul %401, %4, %cst_109 {dimension_numbers = #tpu.dot_dimension_numbers<[1], [0], [0], [1], [0, 0, 1, 1], [], []>} : vector<8x32xbf16>, vector<32x128xbf16>, vector<8x128xf32> -> vector<8x128xf32>
    %403 = arith.addf %400, %402 : vector<8x128xf32>
    %404 = vector.extract_strided_slice %403 {offsets = [0, 0], sizes = [8, 96], strides = [1, 1]} : vector<8x128xf32> to vector<8x96xf32>
    %405 = arith.negf %404 : vector<8x96xf32>
    %406 = math.exp %405 : vector<8x96xf32>
    %cst_110 = arith.constant 1.000000e+00 : f32
    %407 = vector.broadcast %cst_110 : f32 to vector<8x96xf32>
    %408 = arith.addf %407, %406 : vector<8x96xf32>
    %409 = arith.divf %407, %408 : vector<8x96xf32>
    %410 = vector.extract_strided_slice %403 {offsets = [0, 96], sizes = [8, 32], strides = [1, 1]} : vector<8x128xf32> to vector<8x32xf32>
    %411 = math.tanh %410 : vector<8x32xf32>
    %412 = vector.extract_strided_slice %409 {offsets = [0, 32], sizes = [8, 32], strides = [1, 1]} : vector<8x96xf32> to vector<8x32xf32>
    %413 = arith.mulf %412, %392 : vector<8x32xf32>
    %414 = vector.extract_strided_slice %409 {offsets = [0, 0], sizes = [8, 32], strides = [1, 1]} : vector<8x96xf32> to vector<8x32xf32>
    %415 = arith.mulf %414, %411 : vector<8x32xf32>
    %416 = arith.addf %413, %415 : vector<8x32xf32>
    %417 = vector.extract_strided_slice %409 {offsets = [0, 64], sizes = [8, 32], strides = [1, 1]} : vector<8x96xf32> to vector<8x32xf32>
    %418 = math.tanh %416 : vector<8x32xf32>
    %419 = arith.mulf %417, %418 : vector<8x32xf32>
    %c6_i32_111 = arith.constant 6 : i32
    %c8_i32_112 = arith.constant 8 : i32
    %420 = arith.muli %c6_i32_111, %c8_i32_112 : i32
    %421 = tpu.assume_multiple %420, 8 : i32
    %422 = arith.index_cast %421 : i32 to index
    %c0_113 = arith.constant 0 : index
    %423 = vector.load %arg7[%422, %c0_113] : memref<64x256xf32, #tpu.memory_space<vmem>>, vector<8x256xf32>
    %424 = vector.extract_strided_slice %423 {offsets = [0, 0], sizes = [8, 128], strides = [1, 1]} : vector<8x256xf32> to vector<8x128xf32>
    %425 = arith.truncf %419 : vector<8x32xf32> to vector<8x32xbf16>
    %cst_114 = arith.constant dense<0.000000e+00> : vector<8x128xf32>
    %426 = tpu.matmul %425, %4, %cst_114 {dimension_numbers = #tpu.dot_dimension_numbers<[1], [0], [0], [1], [0, 0, 1, 1], [], []>} : vector<8x32xbf16>, vector<32x128xbf16>, vector<8x128xf32> -> vector<8x128xf32>
    %427 = arith.addf %424, %426 : vector<8x128xf32>
    %428 = vector.extract_strided_slice %427 {offsets = [0, 0], sizes = [8, 96], strides = [1, 1]} : vector<8x128xf32> to vector<8x96xf32>
    %429 = arith.negf %428 : vector<8x96xf32>
    %430 = math.exp %429 : vector<8x96xf32>
    %cst_115 = arith.constant 1.000000e+00 : f32
    %431 = vector.broadcast %cst_115 : f32 to vector<8x96xf32>
    %432 = arith.addf %431, %430 : vector<8x96xf32>
    %433 = arith.divf %431, %432 : vector<8x96xf32>
    %434 = vector.extract_strided_slice %427 {offsets = [0, 96], sizes = [8, 32], strides = [1, 1]} : vector<8x128xf32> to vector<8x32xf32>
    %435 = math.tanh %434 : vector<8x32xf32>
    %436 = vector.extract_strided_slice %433 {offsets = [0, 32], sizes = [8, 32], strides = [1, 1]} : vector<8x96xf32> to vector<8x32xf32>
    %437 = arith.mulf %436, %416 : vector<8x32xf32>
    %438 = vector.extract_strided_slice %433 {offsets = [0, 0], sizes = [8, 32], strides = [1, 1]} : vector<8x96xf32> to vector<8x32xf32>
    %439 = arith.mulf %438, %435 : vector<8x32xf32>
    %440 = arith.addf %437, %439 : vector<8x32xf32>
    %441 = vector.extract_strided_slice %433 {offsets = [0, 64], sizes = [8, 32], strides = [1, 1]} : vector<8x96xf32> to vector<8x32xf32>
    %442 = math.tanh %440 : vector<8x32xf32>
    %443 = arith.mulf %441, %442 : vector<8x32xf32>
    %c7_i32_116 = arith.constant 7 : i32
    %c8_i32_117 = arith.constant 8 : i32
    %444 = arith.muli %c7_i32_116, %c8_i32_117 : i32
    %445 = tpu.assume_multiple %444, 8 : i32
    %446 = arith.index_cast %445 : i32 to index
    %c0_118 = arith.constant 0 : index
    %447 = vector.load %arg7[%446, %c0_118] : memref<64x256xf32, #tpu.memory_space<vmem>>, vector<8x256xf32>
    %448 = vector.extract_strided_slice %447 {offsets = [0, 0], sizes = [8, 128], strides = [1, 1]} : vector<8x256xf32> to vector<8x128xf32>
    %449 = arith.truncf %443 : vector<8x32xf32> to vector<8x32xbf16>
    %cst_119 = arith.constant dense<0.000000e+00> : vector<8x128xf32>
    %450 = tpu.matmul %449, %4, %cst_119 {dimension_numbers = #tpu.dot_dimension_numbers<[1], [0], [0], [1], [0, 0, 1, 1], [], []>} : vector<8x32xbf16>, vector<32x128xbf16>, vector<8x128xf32> -> vector<8x128xf32>
    %451 = arith.addf %448, %450 : vector<8x128xf32>
    %452 = vector.extract_strided_slice %451 {offsets = [0, 0], sizes = [8, 96], strides = [1, 1]} : vector<8x128xf32> to vector<8x96xf32>
    %453 = arith.negf %452 : vector<8x96xf32>
    %454 = math.exp %453 : vector<8x96xf32>
    %cst_120 = arith.constant 1.000000e+00 : f32
    %455 = vector.broadcast %cst_120 : f32 to vector<8x96xf32>
    %456 = arith.addf %455, %454 : vector<8x96xf32>
    %457 = arith.divf %455, %456 : vector<8x96xf32>
    %458 = vector.extract_strided_slice %451 {offsets = [0, 96], sizes = [8, 32], strides = [1, 1]} : vector<8x128xf32> to vector<8x32xf32>
    %459 = math.tanh %458 : vector<8x32xf32>
    %460 = vector.extract_strided_slice %457 {offsets = [0, 32], sizes = [8, 32], strides = [1, 1]} : vector<8x96xf32> to vector<8x32xf32>
    %461 = arith.mulf %460, %440 : vector<8x32xf32>
    %462 = vector.extract_strided_slice %457 {offsets = [0, 0], sizes = [8, 32], strides = [1, 1]} : vector<8x96xf32> to vector<8x32xf32>
    %463 = arith.mulf %462, %459 : vector<8x32xf32>
    %464 = arith.addf %461, %463 : vector<8x32xf32>
    %465 = vector.extract_strided_slice %457 {offsets = [0, 64], sizes = [8, 32], strides = [1, 1]} : vector<8x96xf32> to vector<8x32xf32>
    %466 = math.tanh %464 : vector<8x32xf32>
    %467 = arith.mulf %465, %466 : vector<8x32xf32>
    %c8_i32_121 = arith.constant 8 : i32
    %c56 = arith.constant 56 : index
    %c0_122 = arith.constant 0 : index
    %468 = vector.load %arg7[%c56, %c0_122] : memref<64x256xf32, #tpu.memory_space<vmem>>, vector<8x256xf32>
    %469 = vector.extract_strided_slice %468 {offsets = [0, 128], sizes = [8, 128], strides = [1, 1]} : vector<8x256xf32> to vector<8x128xf32>
    %470 = vector.extract_strided_slice %469 {offsets = [0, 0], sizes = [8, 96], strides = [1, 1]} : vector<8x128xf32> to vector<8x96xf32>
    %471 = arith.negf %470 : vector<8x96xf32>
    %472 = math.exp %471 : vector<8x96xf32>
    %cst_123 = arith.constant 1.000000e+00 : f32
    %473 = vector.broadcast %cst_123 : f32 to vector<8x96xf32>
    %474 = arith.addf %473, %472 : vector<8x96xf32>
    %475 = arith.divf %473, %474 : vector<8x96xf32>
    %476 = vector.extract_strided_slice %469 {offsets = [0, 96], sizes = [8, 32], strides = [1, 1]} : vector<8x128xf32> to vector<8x32xf32>
    %477 = math.tanh %476 : vector<8x32xf32>
    %478 = vector.extract_strided_slice %475 {offsets = [0, 0], sizes = [8, 32], strides = [1, 1]} : vector<8x96xf32> to vector<8x32xf32>
    %479 = arith.mulf %478, %477 : vector<8x32xf32>
    %480 = vector.extract_strided_slice %475 {offsets = [0, 64], sizes = [8, 32], strides = [1, 1]} : vector<8x96xf32> to vector<8x32xf32>
    %481 = math.tanh %479 : vector<8x32xf32>
    %482 = arith.mulf %480, %481 : vector<8x32xf32>
    %c0_124 = arith.constant 0 : index
    %c0_125 = arith.constant 0 : index
    %483 = vector.load %arg3[%c0_124, %c0_125] : memref<64x1xf32, #tpu.memory_space<vmem>>, vector<32x1xf32>
    %cst_126 = arith.constant dense<0.000000e+00> : vector<8x1xf32>
    %484 = tpu.matmul %467, %483, %cst_126 {dimension_numbers = #tpu.dot_dimension_numbers<[1], [0], [0], [1], [0, 0, 1, 1], [], []>} : vector<8x32xf32>, vector<32x1xf32>, vector<8x1xf32> -> vector<8x1xf32>
    %c32_127 = arith.constant 32 : index
    %c0_128 = arith.constant 0 : index
    %485 = vector.load %arg3[%c32_127, %c0_128] : memref<64x1xf32, #tpu.memory_space<vmem>>, vector<32x1xf32>
    %cst_129 = arith.constant dense<0.000000e+00> : vector<8x1xf32>
    %486 = tpu.matmul %482, %485, %cst_129 {dimension_numbers = #tpu.dot_dimension_numbers<[1], [0], [0], [1], [0, 0, 1, 1], [], []>} : vector<8x32xf32>, vector<32x1xf32>, vector<8x1xf32> -> vector<8x1xf32>
    %487 = arith.addf %484, %486 : vector<8x1xf32>
    %c0_130 = arith.constant 0 : index
    %c0_131 = arith.constant 0 : index
    %488 = vector.load %arg4[%c0_130, %c0_131] : memref<1x1xf32, #tpu.memory_space<vmem>>, vector<1x1xf32>
    %489 = vector.broadcast %488 : vector<1x1xf32> to vector<8x1xf32>
    %490 = arith.addf %487, %489 : vector<8x1xf32>
    %c0_132 = arith.constant 0 : index
    %c0_133 = arith.constant 0 : index
    %491 = vector.load %arg5[%c0_132, %c0_133] : memref<8x1xf32, #tpu.memory_space<vmem>>, vector<8x1xf32>
    tpu.vector_store %arg5[%c0_132, %c0_133], %490 {strides = array<i32>} : memref<8x1xf32, #tpu.memory_space<vmem>>, vector<8x1xf32>,
    return
  }
}

</mosaic_0001>

<llo_original>
// kernel: tpu_custom_call.1
$region0: #{tpu_custom_call.1}
  #allocation0 [shape = 'u32[]', space=smem, size = 0x4, offset = 0x4, fixed_abs, tag = 'smem constant byte address 0x4 - core index']
  #allocation1 [shape = 'u32[144,128]{1,0:T(1,128)}', space=vmem, size = 0x12000, scoped, tag = 'internal scratch']
  #allocation2 [shape = 'f32[64,256]{1,0:T(8,128)}', space=vmem, size = 0x10000, scoped, tag = 'scratch operand']
  #allocation3 [shape = 'f32[64,256]{1,0:T(8,128)}', space=vmem, size = 0x10000, scoped, tag = 'scratch operand']
  #allocation4 [shape = 'f32[64,64]{1,0:T(8,128)}', space=vmem, size = 0x8000, scoped, tag = 'scratch operand']
  #allocation5 [shape = 'f32[1,1]{1,0:T(1,128)S(1)}', space=vmem, size = 0x200, scoped, tag = 'scoped memory for tpu_custom_call.1']
  %s0 = inlined_call_operand.vmem [shape: bf16[64,16], index: 0, kind: input, shape index: {}]
  %s1 = inlined_call_operand.hbm [shape: bf16[176,256], index: 1, kind: input, shape index: {}]
  %s2 = inlined_call_operand.vmem [shape: f32[16,256], index: 2, kind: input, shape index: {}]
  %s3 = inlined_call_operand.vmem [shape: f32[64,1], index: 3, kind: input, shape index: {}]
  %s4 = inlined_call_operand.<no memory space> [shape: f32[1,1], index: 4, kind: input, shape index: {}]
  %s5 = inlined_call_operand.vmem [shape: f32[8,1], index: 5, kind: output, shape index: {}]
  %s6 = sld [smem:[#allocation0]]
  $region34: #{tpu_custom_call.1} parent=0
    _
  %s8 = ssub.s32 1, %s6
  %s9 = scalar_select 0, %s8, %s6
  %v10 = vstv %s4
  %11 = vst [vmem:[#allocation5] sm:$0x1] %v10
  $region1: #{tpu_custom_call.1} parent=0
    #allocation6 [shape = 'u8[90112]{0}', space=vmem, size = 0x16000, scoped, tag = 'input window, operand 1, single buffered']
    #allocation7 [shape = 's32[1]{0}', space=sflag, size = 0x4, scoped, tag = 'scoped memory for tpu_custom_call.1']
    %12 = vsyncpa [#allocation7], 0
    // Predicated region
    $region2: #{tpu_custom_call.1} parent=1 // pred_check
      _
    $region3: #{tpu_custom_call.1} parent=1 // pred_check_branch
      %14 = sbr.rel (0) target = $region5
    $region4: #{tpu_custom_call.1} parent=1 // pred_region
      _
    $region5: #{tpu_custom_call.1} parent=1 // pred_fallthru
      _
    // Predicated region
    $region6: #{tpu_custom_call.1} parent=1 // pred_check
      _
    $region7: #{tpu_custom_call.1} parent=1 // pred_check_branch
      %16 = sbr.rel (0) target = $region9
    $region8: #{tpu_custom_call.1} parent=1 // pred_region
      %s18 = ssub.s32 2816, 2816
      %19 = vsyncadd [#allocation7], %s18
      %s20 = sshll.u32 [#allocation6], 4
      %s21 = int_to_ptr.vmem [resolvable:$true] %s20
      %26 = dma.hbm_to_vmem [thread:$0]  %s1, 2816, %s21, [#allocation7], 128, 128, 8
    $region9: #{tpu_custom_call.1} parent=1 // pred_fallthru
      _
    // Predicated region
    $region10: #{tpu_custom_call.1} parent=1 // pred_check
      _
    $region11: #{tpu_custom_call.1} parent=1 // pred_check_branch
      %28 = sbr.rel (0) target = $region13
    $region12: #{tpu_custom_call.1} parent=1 // pred_region
      _
    $region13: #{tpu_custom_call.1} parent=1 // pred_fallthru
      _
    // Predicated region
    $region14: #{tpu_custom_call.1} parent=1 // pred_check
      _
    $region15: #{tpu_custom_call.1} parent=1 // pred_check_branch
      %30 = sbr.rel (0) target = $region17
    $region16: #{tpu_custom_call.1} parent=1 // pred_region
      _
    $region17: #{tpu_custom_call.1} parent=1 // pred_fallthru
      _
    // Predicated region
    $region18: #{tpu_custom_call.1} parent=1 // pred_check
      _
    $region19: #{tpu_custom_call.1} parent=1 // pred_check_branch
      %32 = sbr.rel (0) target = $region21
    $region20: #{tpu_custom_call.1} parent=1 // pred_region
      _
    $region21: #{tpu_custom_call.1} parent=1 // pred_fallthru
      _
    // Predicated region
    $region22: #{tpu_custom_call.1} parent=1 // pred_check
      _
    $region23: #{tpu_custom_call.1} parent=1 // pred_check_branch
      %34 = sbr.rel (0) target = $region25
    $region24: #{tpu_custom_call.1} parent=1 // pred_region
      %35 = dma.done [#allocation7], 2816
    $region25: #{tpu_custom_call.1} parent=1 // pred_fallthru
      _
    %v37 = vld [vmem:[#allocation6] sm:$0xff]
    %v38 = vld [vmem:[#allocation6 + $0x8] sm:$0xff]
    %v39 = vld [vmem:[#allocation6 + $0x10] sm:$0xff]
    %v40 = vld [vmem:[#allocation6 + $0x18] sm:$0xff]
    %v41 = vld [vmem:[#allocation6 + $0x20] sm:$0xff]
    %v42 = vld [vmem:[#allocation6 + $0x28] sm:$0xff]
    %v43 = vld [vmem:[#allocation6 + $0x30] sm:$0xff]
    %v44 = vld [vmem:[#allocation6 + $0x38] sm:$0xff]
    %v45 = vld [vmem:[#allocation6 + $0x40] sm:$0xff]
    %v46 = vld [vmem:[#allocation6 + $0x48] sm:$0xff]
    %v47 = vld [vmem:[#allocation6 + $0x50] sm:$0xff]
    %v48 = vld [vmem:[#allocation6 + $0x58] sm:$0xff]
    %v49 = vld [vmem:[#allocation6 + $0x60] sm:$0xff]
    %v50 = vld [vmem:[#allocation6 + $0x68] sm:$0xff]
    %v51 = vld [vmem:[#allocation6 + $0x70] sm:$0xff]
    %v52 = vld [vmem:[#allocation6 + $0x78] sm:$0xff]
    %v53 = vld [vmem:[#allocation6 + $0x80] sm:$0xff]
    %v54 = vld [vmem:[#allocation6 + $0x88] sm:$0xff]
    %v55 = vld [vmem:[#allocation6 + $0x90] sm:$0xff]
    %v56 = vld [vmem:[#allocation6 + $0x98] sm:$0xff]
    %v57 = vld [vmem:[#allocation6 + $0xa0] sm:$0xff]
    %v58 = vld [vmem:[#allocation6 + $0xa8] sm:$0xff]
    %v59 = vld [vmem:[%s2] ss:$8 sm:$0x3]
    %s60 = scalar_lea.vmem %s2, 16
    %v61 = vld [vmem:[%s60] ss:$8 sm:$0x3]
    %v62 = vld [vmem:[%s0] sm:$0xf]
    %v63 = vld [vmem:[%s0 + $0x4] sm:$0xf]
    %v64 = vld [vmem:[%s0 + $0x8] sm:$0xf]
    %v65 = vld [vmem:[%s0 + $0xc] sm:$0xf]
    %v66 = vld [vmem:[%s0 + $0x10] sm:$0xf]
    %v67 = vld [vmem:[%s0 + $0x14] sm:$0xf]
    %v68 = vld [vmem:[%s0 + $0x18] sm:$0xf]
    %v69 = vld [vmem:[%s0 + $0x1c] sm:$0xf]
    %v71 = vlaneseq
    %v72 = vshrl.u32 %v71, 7
    %v73 = vsub.s32 0, %v72
    %v74 = vrot.slane %v59, %v73
    %v75 = vlaneseq
    %v76 = vshrl.u32 %v75, 7
    %v77 = vsub.s32 1, %v76
    %v78 = vrot.slane %v59, %v77
    %v89 = vunpack.c.l.b16 %v62
    %v90 = vunpack.c.l.b16 %v63
    %v91 = vunpack.c.l.b16 %v64
    %v92 = vunpack.c.l.b16 %v65
    %v93 = vunpack.c.l.b16 %v66
    %v94 = vunpack.c.l.b16 %v67
    %v95 = vunpack.c.l.b16 %v68
    %v96 = vunpack.c.l.b16 %v69
    %v97 = vpack.c.b16 %v90, %v89
    %v98 = vpack.c.b16 %v92, %v91
    %v99 = vpack.c.b16 %v94, %v93
    %v100 = vpack.c.b16 %v96, %v95
    %v103 = vunpack.c.l.b16 %v37
    %v104 = vunpack.c.h.b16 %v37
    %v105 = vunpack.c.l.b16 %v38
    %v106 = vunpack.c.h.b16 %v38
    %v107 = vpack.c.b16 %v105, %v103
    %v108 = vpack.c.b16 %v106, %v104
    %vm111 = vcmask 130048
    %v113 = vsel %vm111, %v97, 0
    %v116 = vsel %vm111, %v98, 0
    %v119 = vsel %vm111, %v99, 0
    %v122 = vsel %vm111, %v100, 0
    %124 = vmatprep.subr.bf16.mxu0 %v108
    %125 = vmatpush1.bf16.msra.mxu0 %v107
    %126 = vmatprep.subr.bf16.mxu0 0
    %127 = vmatpush1.bf16.msra.mxu0 0
    %128 = vmatprep.subr.bf16.mxu0 0
    %129 = vmatpush1.bf16.msra.mxu0 0
    %130 = vmatprep.subr.bf16.mxu0 0
    %131 = vmatpush1.bf16.msra.mxu0 0
    %132 = vmatprep.subr.bf16.mxu0 0
    %133 = vmatpush1.bf16.msra.mxu0 0
    %134 = vmatprep.subr.bf16.mxu0 0
    %135 = vmatpush1.bf16.msra.mxu0 0
    %136 = vmatprep.subr.bf16.mxu0 0
    %137 = vmatpush1.bf16.msra.mxu0 0
    %138 = vmatprep.subr.bf16.mxu0 0
    %139 = vmatpush1.bf16.msra.mxu0 0
    %140 = vmatprep.subr.bf16.mxu0 0
    %141 = vmatpush1.bf16.msra.mxu0 0
    %142 = vmatprep.subr.bf16.mxu0 0
    %143 = vmatpush1.bf16.msra.mxu0 0
    %144 = vmatprep.subr.bf16.mxu0 0
    %145 = vmatpush1.bf16.msra.mxu0 0
    %146 = vmatprep.subr.bf16.mxu0 0
    %147 = vmatpush1.bf16.msra.mxu0 0
    %148 = vmatprep.subr.bf16.mxu0 0
    %149 = vmatpush1.bf16.msra.mxu0 0
    %150 = vmatprep.subr.bf16.mxu0 0
    %151 = vmatpush1.bf16.msra.mxu0 0
    %152 = vmatprep.subr.bf16.mxu0 0
    %153 = vmatpush1.bf16.msra.mxu0 0
    %154 = vmatprep.subr.bf16.mxu0 0
    %155 = vmatpush1.bf16.msra.mxu0 0
    %156 = vmatprep.mubr.bf16.mxu0 0
    %157 = vmatmul.mubr.bf16.gmra.mrb[0].mxu0 %v113
    %v158 = vpop.f32.mrb[0].mxu0
    %v159 = vadd.f32 %v74, %v158
    %v160 = vpop.f32.mrb[0].mxu0
    %v161 = vadd.f32 %v78, %v160
    %v162 = vpop.f32.mrb[0].mxu0
    %v163 = vadd.f32 %v74, %v162
    %v164 = vpop.f32.mrb[0].mxu0
    %v165 = vadd.f32 %v78, %v164
    %166 = vmatprep.mubr.bf16.mxu0 0
    %167 = vmatmul.mubr.bf16.gmra.mrb[0].mxu0 %v116
    %v168 = vpop.f32.mrb[0].mxu0
    %v169 = vadd.f32 %v74, %v168
    %v170 = vpop.f32.mrb[0].mxu0
    %v171 = vadd.f32 %v78, %v170
    %v172 = vpop.f32.mrb[0].mxu0
    %v173 = vadd.f32 %v74, %v172
    %v174 = vpop.f32.mrb[0].mxu0
    %v175 = vadd.f32 %v78, %v174
    %176 = vmatprep.mubr.bf16.mxu0 0
    %177 = vmatmul.mubr.bf16.gmra.mrb[0].mxu0 %v119
    %v178 = vpop.f32.mrb[0].mxu0
    %v179 = vadd.f32 %v74, %v178
    %v180 = vpop.f32.mrb[0].mxu0
    %v181 = vadd.f32 %v78, %v180
    %v182 = vpop.f32.mrb[0].mxu0
    %v183 = vadd.f32 %v74, %v182
    %v184 = vpop.f32.mrb[0].mxu0
    %v185 = vadd.f32 %v78, %v184
    %186 = vmatprep.mubr.bf16.mxu0 0
    %187 = vmatmul.mubr.bf16.gmra.mrb[0].mxu0 %v122
    %v188 = vpop.f32.mrb[0].mxu0
    %v189 = vadd.f32 %v74, %v188
    %v190 = vpop.f32.mrb[0].mxu0
    %v191 = vadd.f32 %v78, %v190
    %v192 = vpop.f32.mrb[0].mxu0
    %v193 = vadd.f32 %v74, %v192
    %v194 = vpop.f32.mrb[0].mxu0
    %v195 = vadd.f32 %v78, %v194
    %196 = vdwg.mxu0
    %197 = vst [vmem:[#allocation2] sm:$0xff] %v159
    %198 = vst [vmem:[#allocation2 + $0x8] sm:$0xff] %v161
    %199 = vst [vmem:[#allocation2 + $0x10] sm:$0xff] %v163
    %200 = vst [vmem:[#allocation2 + $0x18] sm:$0xff] %v165
    %201 = vst [vmem:[#allocation2 + $0x20] sm:$0xff] %v169
    %202 = vst [vmem:[#allocation2 + $0x28] sm:$0xff] %v171
    %203 = vst [vmem:[#allocation2 + $0x30] sm:$0xff] %v173
    %204 = vst [vmem:[#allocation2 + $0x38] sm:$0xff] %v175
    %205 = vst [vmem:[#allocation2 + $0x40] sm:$0xff] %v179
    %206 = vst [vmem:[#allocation2 + $0x48] sm:$0xff] %v181
    %207 = vst [vmem:[#allocation2 + $0x50] sm:$0xff] %v183
    %208 = vst [vmem:[#allocation2 + $0x58] sm:$0xff] %v185
    %209 = vst [vmem:[#allocation2 + $0x60] sm:$0xff] %v189
    %210 = vst [vmem:[#allocation2 + $0x68] sm:$0xff] %v191
    %211 = vst [vmem:[#allocation2 + $0x70] sm:$0xff] %v193
    %212 = vst [vmem:[#allocation2 + $0x78] sm:$0xff] %v195
    %s213 = smul.u32 0, 2
    %s214 = smul.addr %s213, 8
    %s215 = scalar_lea.vmem [#allocation2], %s214
    %v216 = vld [vmem:[%s215] sm:$0xff]
    %v217 = vld [vmem:[%s215 + $0x8] sm:$0xff]
    %v226 = vunpack.c.l.b16 %v39
    %v227 = vunpack.c.h.b16 %v39
    %v228 = vunpack.c.l.b16 %v40
    %v229 = vunpack.c.h.b16 %v40
    %v230 = vunpack.c.l.b16 %v41
    %v231 = vunpack.c.h.b16 %v41
    %v232 = vunpack.c.l.b16 %v42
    %v233 = vunpack.c.h.b16 %v42
    %v234 = vunpack.c.l.b16 %v43
    %v235 = vunpack.c.h.b16 %v43
    %v236 = vunpack.c.l.b16 %v44
    %v237 = vunpack.c.h.b16 %v44
    %v238 = vunpack.c.l.b16 %v45
    %v239 = vunpack.c.h.b16 %v45
    %v240 = vunpack.c.l.b16 %v46
    %v241 = vunpack.c.h.b16 %v46
    %v242 = vpack.c.b16 %v228, %v226
    %v243 = vpack.c.b16 %v229, %v227
    %v244 = vpack.c.b16 %v232, %v230
    %v245 = vpack.c.b16 %v233, %v231
    %v246 = vpack.c.b16 %v236, %v234
    %v247 = vpack.c.b16 %v237, %v235
    %v248 = vpack.c.b16 %v240, %v238
    %v249 = vpack.c.b16 %v241, %v239
    %vm258 = vcmask 523264
    %v260 = vsel %vm258, 0, 0
    %262 = vmatprep.subr.bf16.mxu0 %v243
    %263 = vmatpush1.bf16.msra.mxu0 %v242
    %264 = vmatprep.subr.bf16.mxu0 %v245
    %265 = vmatpush1.bf16.msra.mxu0 %v244
    %266 = vmatprep.subr.bf16.mxu0 %v247
    %267 = vmatpush1.bf16.msra.mxu0 %v246
    %268 = vmatprep.subr.bf16.mxu0 %v249
    %269 = vmatpush1.bf16.msra.mxu0 %v248
    %270 = vmatprep.subr.bf16.mxu0 0
    %271 = vmatpush1.bf16.msra.mxu0 0
    %272 = vmatprep.subr.bf16.mxu0 0
    %273 = vmatpush1.bf16.msra.mxu0 0
    %274 = vmatprep.subr.bf16.mxu0 0
    %275 = vmatpush1.bf16.msra.mxu0 0
    %276 = vmatprep.subr.bf16.mxu0 0
    %277 = vmatpush1.bf16.msra.mxu0 0
    %278 = vmatprep.subr.bf16.mxu0 0
    %279 = vmatpush1.bf16.msra.mxu0 0
    %280 = vmatprep.subr.bf16.mxu0 0
    %281 = vmatpush1.bf16.msra.mxu0 0
    %282 = vmatprep.subr.bf16.mxu0 0
    %283 = vmatpush1.bf16.msra.mxu0 0
    %284 = vmatprep.subr.bf16.mxu0 0
    %285 = vmatpush1.bf16.msra.mxu0 0
    %286 = vmatprep.subr.bf16.mxu0 0
    %287 = vmatpush1.bf16.msra.mxu0 0
    %288 = vmatprep.subr.bf16.mxu0 0
    %289 = vmatpush1.bf16.msra.mxu0 0
    %290 = vmatprep.subr.bf16.mxu0 0
    %291 = vmatpush1.bf16.msra.mxu0 0
    %292 = vmatprep.subr.bf16.mxu0 0
    %293 = vmatpush1.bf16.msra.mxu0 0
    %294 = vmatprep.mubr.bf16.mxu0 0
    %295 = vmatmul.mubr.bf16.gmra.mrb[0].mxu0 %v260
    %v296 = vpop.f32.mrb[0].mxu0
    %v297 = vadd.f32 0.0, %v296
    %v298 = vpop.f32.mrb[0].mxu0
    %v299 = vadd.f32 0.0, %v298
    %v300 = vpop.f32.mrb[0].mxu0
    %v301 = vpop.f32.mrb[0].mxu0
    %302 = vdwg.mxu0
    %v303 = vadd.f32 %v216, %v297
    %v304 = vadd.f32 %v217, %v299
    %v305 = vxor.u32 %v303, 2147483648
    %v306 = vxor.u32 %v304, 2147483648
    %v307 = vmul.f32 %v305, 1.442695
    %v308 = vpow.pop %v307
    %v309 = vmul.f32 %v306, 1.442695
    %v310 = vpow.pop %v309
    %v311 = vadd.f32 %v308, 1.0
    %v312 = vadd.f32 %v310, 1.0
    %v313 = vrcp.pop %v311
    %v314 = vmul.f32 1.0, %v313
    %v315 = vrcp.pop %v312
    %v316 = vmul.f32 1.0, %v315
    %v317 = vtanh.pop %v304
    %v318 = vmul.f32 %v314, 0.0
    %320 = vrot.lane.b32.xlu0 %v317, 64
    %v321 = vpop.permute.xlu0 %320
    %v323 = vmul.f32 %v314, %v321
    %325 = vrot.lane.b32.xlu0 %v323, 64
    %v326 = vpop.permute.xlu0 %325
    %v328 = vadd.f32 %v318, %v326
    %v329 = vtanh.pop %v328
    %331 = vrot.lane.b32.xlu0 %v329, 64
    %v332 = vpop.permute.xlu0 %331
    %v334 = vmul.f32 %v316, %v332
    %vm335 = vcmask 261120
    %336 = vst.msk [vmem:[#allocation4] sm:$0xff] %vm335, %v334
    %s337 = scalar_lea.vmem [#allocation4], 56
    %vm338 = vcmask 523520
    %339 = vst.msk [vmem:[%s337] sm:$0xff] %vm338, %v334
    %s340 = smul.u32 1, 2
    %s341 = smul.addr %s340, 8
    %s342 = scalar_lea.vmem [#allocation2], %s341
    %v343 = vld [vmem:[%s342] sm:$0xff]
    %v344 = vld [vmem:[%s342 + $0x8] sm:$0xff]
    %v345 = vpack.c.bf16 %v334, %v334
    %v347 = vsel %vm258, %v345, 0
    %349 = vmatprep.subr.bf16.mxu0 %v243
    %350 = vmatpush1.bf16.msra.mxu0 %v242
    %351 = vmatprep.subr.bf16.mxu0 %v245
    %352 = vmatpush1.bf16.msra.mxu0 %v244
    %353 = vmatprep.subr.bf16.mxu0 %v247
    %354 = vmatpush1.bf16.msra.mxu0 %v246
    %355 = vmatprep.subr.bf16.mxu0 %v249
    %356 = vmatpush1.bf16.msra.mxu0 %v248
    %357 = vmatprep.subr.bf16.mxu0 0
    %358 = vmatpush1.bf16.msra.mxu0 0
    %359 = vmatprep.subr.bf16.mxu0 0
    %360 = vmatpush1.bf16.msra.mxu0 0
    %361 = vmatprep.subr.bf16.mxu0 0
    %362 = vmatpush1.bf16.msra.mxu0 0
    %363 = vmatprep.subr.bf16.mxu0 0
    %364 = vmatpush1.bf16.msra.mxu0 0
    %365 = vmatprep.subr.bf16.mxu0 0
    %366 = vmatpush1.bf16.msra.mxu0 0
    %367 = vmatprep.subr.bf16.mxu0 0
    %368 = vmatpush1.bf16.msra.mxu0 0
    %369 = vmatprep.subr.bf16.mxu0 0
    %370 = vmatpush1.bf16.msra.mxu0 0
    %371 = vmatprep.subr.bf16.mxu0 0
    %372 = vmatpush1.bf16.msra.mxu0 0
    %373 = vmatprep.subr.bf16.mxu0 0
    %374 = vmatpush1.bf16.msra.mxu0 0
    %375 = vmatprep.subr.bf16.mxu0 0
    %376 = vmatpush1.bf16.msra.mxu0 0
    %377 = vmatprep.subr.bf16.mxu0 0
    %378 = vmatpush1.bf16.msra.mxu0 0
    %379 = vmatprep.subr.bf16.mxu0 0
    %380 = vmatpush1.bf16.msra.mxu0 0
    %381 = vmatprep.mubr.bf16.mxu0 0
    %382 = vmatmul.mubr.bf16.gmra.mrb[0].mxu0 %v347
    %v383 = vpop.f32.mrb[0].mxu0
    %v384 = vadd.f32 0.0, %v383
    %v385 = vpop.f32.mrb[0].mxu0
    %v386 = vadd.f32 0.0, %v385
    %v387 = vpop.f32.mrb[0].mxu0
    %v388 = vpop.f32.mrb[0].mxu0
    %389 = vdwg.mxu0
    %v390 = vadd.f32 %v343, %v384
    %v391 = vadd.f32 %v344, %v386
    %v392 = vxor.u32 %v390, 2147483648
    %v393 = vxor.u32 %v391, 2147483648
    %v394 = vmul.f32 %v392, 1.442695
    %v395 = vpow.pop %v394
    %v396 = vmul.f32 %v393, 1.442695
    %v397 = vpow.pop %v396
    %v398 = vadd.f32 %v395, 1.0
    %v399 = vadd.f32 %v397, 1.0
    %v400 = vrcp.pop %v398
    %v401 = vmul.f32 1.0, %v400
    %v402 = vrcp.pop %v399
    %v403 = vmul.f32 1.0, %v402
    %v404 = vtanh.pop %v391
    %v405 = vmul.f32 %v401, %v328
    %407 = vrot.lane.b32.xlu0 %v404, 64
    %v408 = vpop.permute.xlu0 %407
    %v410 = vmul.f32 %v401, %v408
    %412 = vrot.lane.b32.xlu0 %v410, 64
    %v413 = vpop.permute.xlu0 %412
    %v415 = vadd.f32 %v405, %v413
    %v416 = vtanh.pop %v415
    %418 = vrot.lane.b32.xlu0 %v416, 64
    %v419 = vpop.permute.xlu0 %418
    %v421 = vmul.f32 %v403, %v419
    %s422 = scalar_lea.vmem [#allocation4], 8
    %423 = vst.msk [vmem:[%s422] sm:$0xff] %vm335, %v421
    %s424 = scalar_lea.vmem [#allocation4], 48
    %425 = vst.msk [vmem:[%s424] sm:$0xff] %vm338, %v421
    %s426 = smul.u32 2, 2
    %s427 = smul.addr %s426, 8
    %s428 = scalar_lea.vmem [#allocation2], %s427
    %v429 = vld [vmem:[%s428] sm:$0xff]
    %v430 = vld [vmem:[%s428 + $0x8] sm:$0xff]
    %v431 = vpack.c.bf16 %v421, %v421
    %v433 = vsel %vm258, %v431, 0
    %435 = vmatprep.subr.bf16.mxu0 %v243
    %436 = vmatpush1.bf16.msra.mxu0 %v242
    %437 = vmatprep.subr.bf16.mxu0 %v245
    %438 = vmatpush1.bf16.msra.mxu0 %v244
    %439 = vmatprep.subr.bf16.mxu0 %v247
    %440 = vmatpush1.bf16.msra.mxu0 %v246
    %441 = vmatprep.subr.bf16.mxu0 %v249
    %442 = vmatpush1.bf16.msra.mxu0 %v248
    %443 = vmatprep.subr.bf16.mxu0 0
    %444 = vmatpush1.bf16.msra.mxu0 0
    %445 = vmatprep.subr.bf16.mxu0 0
    %446 = vmatpush1.bf16.msra.mxu0 0
    %447 = vmatprep.subr.bf16.mxu0 0
    %448 = vmatpush1.bf16.msra.mxu0 0
    %449 = vmatprep.subr.bf16.mxu0 0
    %450 = vmatpush1.bf16.msra.mxu0 0
    %451 = vmatprep.subr.bf16.mxu0 0
    %452 = vmatpush1.bf16.msra.mxu0 0
    %453 = vmatprep.subr.bf16.mxu0 0
    %454 = vmatpush1.bf16.msra.mxu0 0
    %455 = vmatprep.subr.bf16.mxu0 0
    %456 = vmatpush1.bf16.msra.mxu0 0
    %457 = vmatprep.subr.bf16.mxu0 0
    %458 = vmatpush1.bf16.msra.mxu0 0
    %459 = vmatprep.subr.bf16.mxu0 0
    %460 = vmatpush1.bf16.msra.mxu0 0
    %461 = vmatprep.subr.bf16.mxu0 0
    %462 = vmatpush1.bf16.msra.mxu0 0
    %463 = vmatprep.subr.bf16.mxu0 0
    %464 = vmatpush1.bf16.msra.mxu0 0
    %465 = vmatprep.subr.bf16.mxu0 0
    %466 = vmatpush1.bf16.msra.mxu0 0
    %467 = vmatprep.mubr.bf16.mxu0 0
    %468 = vmatmul.mubr.bf16.gmra.mrb[0].mxu0 %v433
    %v469 = vpop.f32.mrb[0].mxu0
    %v470 = vadd.f32 0.0, %v469
    %v471 = vpop.f32.mrb[0].mxu0
    %v472 = vadd.f32 0.0, %v471
    %v473 = vpop.f32.mrb[0].mxu0
    %v474 = vpop.f32.mrb[0].mxu0
    %475 = vdwg.mxu0
    %v476 = vadd.f32 %v429, %v470
    %v477 = vadd.f32 %v430, %v472
    %v478 = vxor.u32 %v476, 2147483648
    %v479 = vxor.u32 %v477, 2147483648
    %v480 = vmul.f32 %v478, 1.442695
    %v481 = vpow.pop %v480
    %v482 = vmul.f32 %v479, 1.442695
    %v483 = vpow.pop %v482
    %v484 = vadd.f32 %v481, 1.0
    %v485 = vadd.f32 %v483, 1.0
    %v486 = vrcp.pop %v484
    %v487 = vmul.f32 1.0, %v486
    %v488 = vrcp.pop %v485
    %v489 = vmul.f32 1.0, %v488
    %v490 = vtanh.pop %v477
    %v491 = vmul.f32 %v487, %v415
    %493 = vrot.lane.b32.xlu0 %v490, 64
    %v494 = vpop.permute.xlu0 %493
    %v496 = vmul.f32 %v487, %v494
    %498 = vrot.lane.b32.xlu0 %v496, 64
    %v499 = vpop.permute.xlu0 %498
    %v501 = vadd.f32 %v491, %v499
    %v502 = vtanh.pop %v501
    %504 = vrot.lane.b32.xlu0 %v502, 64
    %v505 = vpop.permute.xlu0 %504
    %v507 = vmul.f32 %v489, %v505
    %s508 = scalar_lea.vmem [#allocation4], 16
    %509 = vst.msk [vmem:[%s508] sm:$0xff] %vm335, %v507
    %s510 = scalar_lea.vmem [#allocation4], 40
    %511 = vst.msk [vmem:[%s510] sm:$0xff] %vm338, %v507
    %s512 = smul.u32 3, 2
    %s513 = smul.addr %s512, 8
    %s514 = scalar_lea.vmem [#allocation2], %s513
    %v515 = vld [vmem:[%s514] sm:$0xff]
    %v516 = vld [vmem:[%s514 + $0x8] sm:$0xff]
    %v517 = vpack.c.bf16 %v507, %v507
    %v519 = vsel %vm258, %v517, 0
    %521 = vmatprep.subr.bf16.mxu0 %v243
    %522 = vmatpush1.bf16.msra.mxu0 %v242
    %523 = vmatprep.subr.bf16.mxu0 %v245
    %524 = vmatpush1.bf16.msra.mxu0 %v244
    %525 = vmatprep.subr.bf16.mxu0 %v247
    %526 = vmatpush1.bf16.msra.mxu0 %v246
    %527 = vmatprep.subr.bf16.mxu0 %v249
    %528 = vmatpush1.bf16.msra.mxu0 %v248
    %529 = vmatprep.subr.bf16.mxu0 0
    %530 = vmatpush1.bf16.msra.mxu0 0
    %531 = vmatprep.subr.bf16.mxu0 0
    %532 = vmatpush1.bf16.msra.mxu0 0
    %533 = vmatprep.subr.bf16.mxu0 0
    %534 = vmatpush1.bf16.msra.mxu0 0
    %535 = vmatprep.subr.bf16.mxu0 0
    %536 = vmatpush1.bf16.msra.mxu0 0
    %537 = vmatprep.subr.bf16.mxu0 0
    %538 = vmatpush1.bf16.msra.mxu0 0
    %539 = vmatprep.subr.bf16.mxu0 0
    %540 = vmatpush1.bf16.msra.mxu0 0
    %541 = vmatprep.subr.bf16.mxu0 0
    %542 = vmatpush1.bf16.msra.mxu0 0
    %543 = vmatprep.subr.bf16.mxu0 0
    %544 = vmatpush1.bf16.msra.mxu0 0
    %545 = vmatprep.subr.bf16.mxu0 0
    %546 = vmatpush1.bf16.msra.mxu0 0
    %547 = vmatprep.subr.bf16.mxu0 0
    %548 = vmatpush1.bf16.msra.mxu0 0
    %549 = vmatprep.subr.bf16.mxu0 0
    %550 = vmatpush1.bf16.msra.mxu0 0
    %551 = vmatprep.subr.bf16.mxu0 0
    %552 = vmatpush1.bf16.msra.mxu0 0
    %553 = vmatprep.mubr.bf16.mxu0 0
    %554 = vmatmul.mubr.bf16.gmra.mrb[0].mxu0 %v519
    %v555 = vpop.f32.mrb[0].mxu0
    %v556 = vadd.f32 0.0, %v555
    %v557 = vpop.f32.mrb[0].mxu0
    %v558 = vadd.f32 0.0, %v557
    %v559 = vpop.f32.mrb[0].mxu0
    %v560 = vpop.f32.mrb[0].mxu0
    %561 = vdwg.mxu0
    %v562 = vadd.f32 %v515, %v556
    %v563 = vadd.f32 %v516, %v558
    %v564 = vxor.u32 %v562, 2147483648
    %v565 = vxor.u32 %v563, 2147483648
    %v566 = vmul.f32 %v564, 1.442695
    %v567 = vpow.pop %v566
    %v568 = vmul.f32 %v565, 1.442695
    %v569 = vpow.pop %v568
    %v570 = vadd.f32 %v567, 1.0
    %v571 = vadd.f32 %v569, 1.0
    %v572 = vrcp.pop %v570
    %v573 = vmul.f32 1.0, %v572
    %v574 = vrcp.pop %v571
    %v575 = vmul.f32 1.0, %v574
    %v576 = vtanh.pop %v563
    %v577 = vmul.f32 %v573, %v501
    %579 = vrot.lane.b32.xlu0 %v576, 64
    %v580 = vpop.permute.xlu0 %579
    %v582 = vmul.f32 %v573, %v580
    %584 = vrot.lane.b32.xlu0 %v582, 64
    %v585 = vpop.permute.xlu0 %584
    %v587 = vadd.f32 %v577, %v585
    %v588 = vtanh.pop %v587
    %590 = vrot.lane.b32.xlu0 %v588, 64
    %v591 = vpop.permute.xlu0 %590
    %v593 = vmul.f32 %v575, %v591
    %s594 = scalar_lea.vmem [#allocation4], 24
    %595 = vst.msk [vmem:[%s594] sm:$0xff] %vm335, %v593
    %s596 = scalar_lea.vmem [#allocation4], 32
    %597 = vst.msk [vmem:[%s596] sm:$0xff] %vm338, %v593
    %s598 = smul.u32 4, 2
    %s599 = smul.addr %s598, 8
    %s600 = scalar_lea.vmem [#allocation2], %s599
    %v601 = vld [vmem:[%s600] sm:$0xff]
    %v602 = vld [vmem:[%s600 + $0x8] sm:$0xff]
    %v603 = vpack.c.bf16 %v593, %v593
    %v605 = vsel %vm258, %v603, 0
    %607 = vmatprep.subr.bf16.mxu0 %v243
    %608 = vmatpush1.bf16.msra.mxu0 %v242
    %609 = vmatprep.subr.bf16.mxu0 %v245
    %610 = vmatpush1.bf16.msra.mxu0 %v244
    %611 = vmatprep.subr.bf16.mxu0 %v247
    %612 = vmatpush1.bf16.msra.mxu0 %v246
    %613 = vmatprep.subr.bf16.mxu0 %v249
    %614 = vmatpush1.bf16.msra.mxu0 %v248
    %615 = vmatprep.subr.bf16.mxu0 0
    %616 = vmatpush1.bf16.msra.mxu0 0
    %617 = vmatprep.subr.bf16.mxu0 0
    %618 = vmatpush1.bf16.msra.mxu0 0
    %619 = vmatprep.subr.bf16.mxu0 0
    %620 = vmatpush1.bf16.msra.mxu0 0
    %621 = vmatprep.subr.bf16.mxu0 0
    %622 = vmatpush1.bf16.msra.mxu0 0
    %623 = vmatprep.subr.bf16.mxu0 0
    %624 = vmatpush1.bf16.msra.mxu0 0
    %625 = vmatprep.subr.bf16.mxu0 0
    %626 = vmatpush1.bf16.msra.mxu0 0
    %627 = vmatprep.subr.bf16.mxu0 0
    %628 = vmatpush1.bf16.msra.mxu0 0
    %629 = vmatprep.subr.bf16.mxu0 0
    %630 = vmatpush1.bf16.msra.mxu0 0
    %631 = vmatprep.subr.bf16.mxu0 0
    %632 = vmatpush1.bf16.msra.mxu0 0
    %633 = vmatprep.subr.bf16.mxu0 0
    %634 = vmatpush1.bf16.msra.mxu0 0
    %635 = vmatprep.subr.bf16.mxu0 0
    %636 = vmatpush1.bf16.msra.mxu0 0
    %637 = vmatprep.subr.bf16.mxu0 0
    %638 = vmatpush1.bf16.msra.mxu0 0
    %639 = vmatprep.mubr.bf16.mxu0 0
    %640 = vmatmul.mubr.bf16.gmra.mrb[0].mxu0 %v605
    %v641 = vpop.f32.mrb[0].mxu0
    %v642 = vadd.f32 0.0, %v641
    %v643 = vpop.f32.mrb[0].mxu0
    %v644 = vadd.f32 0.0, %v643
    %v645 = vpop.f32.mrb[0].mxu0
    %v646 = vpop.f32.mrb[0].mxu0
    %647 = vdwg.mxu0
    %v648 = vadd.f32 %v601, %v642
    %v649 = vadd.f32 %v602, %v644
    %v650 = vxor.u32 %v648, 2147483648
    %v651 = vxor.u32 %v649, 2147483648
    %v652 = vmul.f32 %v650, 1.442695
    %v653 = vpow.pop %v652
    %v654 = vmul.f32 %v651, 1.442695
    %v655 = vpow.pop %v654
    %v656 = vadd.f32 %v653, 1.0
    %v657 = vadd.f32 %v655, 1.0
    %v658 = vrcp.pop %v656
    %v659 = vmul.f32 1.0, %v658
    %v660 = vrcp.pop %v657
    %v661 = vmul.f32 1.0, %v660
    %v662 = vtanh.pop %v649
    %v663 = vmul.f32 %v659, %v587
    %665 = vrot.lane.b32.xlu0 %v662, 64
    %v666 = vpop.permute.xlu0 %665
    %v668 = vmul.f32 %v659, %v666
    %670 = vrot.lane.b32.xlu0 %v668, 64
    %v671 = vpop.permute.xlu0 %670
    %v673 = vadd.f32 %v663, %v671
    %v674 = vtanh.pop %v673
    %676 = vrot.lane.b32.xlu0 %v674, 64
    %v677 = vpop.permute.xlu0 %676
    %v679 = vmul.f32 %v661, %v677
    %680 = vst.msk [vmem:[%s596] sm:$0xff] %vm335, %v679
    %681 = vst.msk [vmem:[%s594] sm:$0xff] %vm338, %v679
    %s682 = smul.u32 5, 2
    %s683 = smul.addr %s682, 8
    %s684 = scalar_lea.vmem [#allocation2], %s683
    %v685 = vld [vmem:[%s684] sm:$0xff]
    %v686 = vld [vmem:[%s684 + $0x8] sm:$0xff]
    %v687 = vpack.c.bf16 %v679, %v679
    %v689 = vsel %vm258, %v687, 0
    %691 = vmatprep.subr.bf16.mxu0 %v243
    %692 = vmatpush1.bf16.msra.mxu0 %v242
    %693 = vmatprep.subr.bf16.mxu0 %v245
    %694 = vmatpush1.bf16.msra.mxu0 %v244
    %695 = vmatprep.subr.bf16.mxu0 %v247
    %696 = vmatpush1.bf16.msra.mxu0 %v246
    %697 = vmatprep.subr.bf16.mxu0 %v249
    %698 = vmatpush1.bf16.msra.mxu0 %v248
    %699 = vmatprep.subr.bf16.mxu0 0
    %700 = vmatpush1.bf16.msra.mxu0 0
    %701 = vmatprep.subr.bf16.mxu0 0
    %702 = vmatpush1.bf16.msra.mxu0 0
    %703 = vmatprep.subr.bf16.mxu0 0
    %704 = vmatpush1.bf16.msra.mxu0 0
    %705 = vmatprep.subr.bf16.mxu0 0
    %706 = vmatpush1.bf16.msra.mxu0 0
    %707 = vmatprep.subr.bf16.mxu0 0
    %708 = vmatpush1.bf16.msra.mxu0 0
    %709 = vmatprep.subr.bf16.mxu0 0
    %710 = vmatpush1.bf16.msra.mxu0 0
    %711 = vmatprep.subr.bf16.mxu0 0
    %712 = vmatpush1.bf16.msra.mxu0 0
    %713 = vmatprep.subr.bf16.mxu0 0
    %714 = vmatpush1.bf16.msra.mxu0 0
    %715 = vmatprep.subr.bf16.mxu0 0
    %716 = vmatpush1.bf16.msra.mxu0 0
    %717 = vmatprep.subr.bf16.mxu0 0
    %718 = vmatpush1.bf16.msra.mxu0 0
    %719 = vmatprep.subr.bf16.mxu0 0
    %720 = vmatpush1.bf16.msra.mxu0 0
    %721 = vmatprep.subr.bf16.mxu0 0
    %722 = vmatpush1.bf16.msra.mxu0 0
    %723 = vmatprep.mubr.bf16.mxu0 0
    %724 = vmatmul.mubr.bf16.gmra.mrb[0].mxu0 %v689
    %v725 = vpop.f32.mrb[0].mxu0
    %v726 = vadd.f32 0.0, %v725
    %v727 = vpop.f32.mrb[0].mxu0
    %v728 = vadd.f32 0.0, %v727
    %v729 = vpop.f32.mrb[0].mxu0
    %v730 = vpop.f32.mrb[0].mxu0
    %731 = vdwg.mxu0
    %v732 = vadd.f32 %v685, %v726
    %v733 = vadd.f32 %v686, %v728
    %v734 = vxor.u32 %v732, 2147483648
    %v735 = vxor.u32 %v733, 2147483648
    %v736 = vmul.f32 %v734, 1.442695
    %v737 = vpow.pop %v736
    %v738 = vmul.f32 %v735, 1.442695
    %v739 = vpow.pop %v738
    %v740 = vadd.f32 %v737, 1.0
    %v741 = vadd.f32 %v739, 1.0
    %v742 = vrcp.pop %v740
    %v743 = vmul.f32 1.0, %v742
    %v744 = vrcp.pop %v741
    %v745 = vmul.f32 1.0, %v744
    %v746 = vtanh.pop %v733
    %v747 = vmul.f32 %v743, %v673
    %749 = vrot.lane.b32.xlu0 %v746, 64
    %v750 = vpop.permute.xlu0 %749
    %v752 = vmul.f32 %v743, %v750
    %754 = vrot.lane.b32.xlu0 %v752, 64
    %v755 = vpop.permute.xlu0 %754
    %v757 = vadd.f32 %v747, %v755
    %v758 = vtanh.pop %v757
    %760 = vrot.lane.b32.xlu0 %v758, 64
    %v761 = vpop.permute.xlu0 %760
    %v763 = vmul.f32 %v745, %v761
    %764 = vst.msk [vmem:[%s510] sm:$0xff] %vm335, %v763
    %765 = vst.msk [vmem:[%s508] sm:$0xff] %vm338, %v763
    %s766 = smul.u32 6, 2
    %s767 = smul.addr %s766, 8
    %s768 = scalar_lea.vmem [#allocation2], %s767
    %v769 = vld [vmem:[%s768] sm:$0xff]
    %v770 = vld [vmem:[%s768 + $0x8] sm:$0xff]
    %v771 = vpack.c.bf16 %v763, %v763
    %v773 = vsel %vm258, %v771, 0
    %775 = vmatprep.subr.bf16.mxu0 %v243
    %776 = vmatpush1.bf16.msra.mxu0 %v242
    %777 = vmatprep.subr.bf16.mxu0 %v245
    %778 = vmatpush1.bf16.msra.mxu0 %v244
    %779 = vmatprep.subr.bf16.mxu0 %v247
    %780 = vmatpush1.bf16.msra.mxu0 %v246
    %781 = vmatprep.subr.bf16.mxu0 %v249
    %782 = vmatpush1.bf16.msra.mxu0 %v248
    %783 = vmatprep.subr.bf16.mxu0 0
    %784 = vmatpush1.bf16.msra.mxu0 0
    %785 = vmatprep.subr.bf16.mxu0 0
    %786 = vmatpush1.bf16.msra.mxu0 0
    %787 = vmatprep.subr.bf16.mxu0 0
    %788 = vmatpush1.bf16.msra.mxu0 0
    %789 = vmatprep.subr.bf16.mxu0 0
    %790 = vmatpush1.bf16.msra.mxu0 0
    %791 = vmatprep.subr.bf16.mxu0 0
    %792 = vmatpush1.bf16.msra.mxu0 0
    %793 = vmatprep.subr.bf16.mxu0 0
    %794 = vmatpush1.bf16.msra.mxu0 0
    %795 = vmatprep.subr.bf16.mxu0 0
    %796 = vmatpush1.bf16.msra.mxu0 0
    %797 = vmatprep.subr.bf16.mxu0 0
    %798 = vmatpush1.bf16.msra.mxu0 0
    %799 = vmatprep.subr.bf16.mxu0 0
    %800 = vmatpush1.bf16.msra.mxu0 0
    %801 = vmatprep.subr.bf16.mxu0 0
    %802 = vmatpush1.bf16.msra.mxu0 0
    %803 = vmatprep.subr.bf16.mxu0 0
    %804 = vmatpush1.bf16.msra.mxu0 0
    %805 = vmatprep.subr.bf16.mxu0 0
    %806 = vmatpush1.bf16.msra.mxu0 0
    %807 = vmatprep.mubr.bf16.mxu0 0
    %808 = vmatmul.mubr.bf16.gmra.mrb[0].mxu0 %v773
    %v809 = vpop.f32.mrb[0].mxu0
    %v810 = vadd.f32 0.0, %v809
    %v811 = vpop.f32.mrb[0].mxu0
    %v812 = vadd.f32 0.0, %v811
    %v813 = vpop.f32.mrb[0].mxu0
    %v814 = vpop.f32.mrb[0].mxu0
    %815 = vdwg.mxu0
    %v816 = vadd.f32 %v769, %v810
    %v817 = vadd.f32 %v770, %v812
    %v818 = vxor.u32 %v816, 2147483648
    %v819 = vxor.u32 %v817, 2147483648
    %v820 = vmul.f32 %v818, 1.442695
    %v821 = vpow.pop %v820
    %v822 = vmul.f32 %v819, 1.442695
    %v823 = vpow.pop %v822
    %v824 = vadd.f32 %v821, 1.0
    %v825 = vadd.f32 %v823, 1.0
    %v826 = vrcp.pop %v824
    %v827 = vmul.f32 1.0, %v826
    %v828 = vrcp.pop %v825
    %v829 = vmul.f32 1.0, %v828
    %v830 = vtanh.pop %v817
    %v831 = vmul.f32 %v827, %v757
    %833 = vrot.lane.b32.xlu0 %v830, 64
    %v834 = vpop.permute.xlu0 %833
    %v836 = vmul.f32 %v827, %v834
    %838 = vrot.lane.b32.xlu0 %v836, 64
    %v839 = vpop.permute.xlu0 %838
    %v841 = vadd.f32 %v831, %v839
    %v842 = vtanh.pop %v841
    %844 = vrot.lane.b32.xlu0 %v842, 64
    %v845 = vpop.permute.xlu0 %844
    %v847 = vmul.f32 %v829, %v845
    %848 = vst.msk [vmem:[%s424] sm:$0xff] %vm335, %v847
    %849 = vst.msk [vmem:[%s422] sm:$0xff] %vm338, %v847
    %s850 = smul.u32 7, 2
    %s851 = smul.addr %s850, 8
    %s852 = scalar_lea.vmem [#allocation2], %s851
    %v853 = vld [vmem:[%s852] sm:$0xff]
    %v854 = vld [vmem:[%s852 + $0x8] sm:$0xff]
    %v855 = vpack.c.bf16 %v847, %v847
    %v857 = vsel %vm258, %v855, 0
    %859 = vmatprep.subr.bf16.mxu0 %v243
    %860 = vmatpush1.bf16.msra.mxu0 %v242
    %861 = vmatprep.subr.bf16.mxu0 %v245
    %862 = vmatpush1.bf16.msra.mxu0 %v244
    %863 = vmatprep.subr.bf16.mxu0 %v247
    %864 = vmatpush1.bf16.msra.mxu0 %v246
    %865 = vmatprep.subr.bf16.mxu0 %v249
    %866 = vmatpush1.bf16.msra.mxu0 %v248
    %867 = vmatprep.subr.bf16.mxu0 0
    %868 = vmatpush1.bf16.msra.mxu0 0
    %869 = vmatprep.subr.bf16.mxu0 0
    %870 = vmatpush1.bf16.msra.mxu0 0
    %871 = vmatprep.subr.bf16.mxu0 0
    %872 = vmatpush1.bf16.msra.mxu0 0
    %873 = vmatprep.subr.bf16.mxu0 0
    %874 = vmatpush1.bf16.msra.mxu0 0
    %875 = vmatprep.subr.bf16.mxu0 0
    %876 = vmatpush1.bf16.msra.mxu0 0
    %877 = vmatprep.subr.bf16.mxu0 0
    %878 = vmatpush1.bf16.msra.mxu0 0
    %879 = vmatprep.subr.bf16.mxu0 0
    %880 = vmatpush1.bf16.msra.mxu0 0
    %881 = vmatprep.subr.bf16.mxu0 0
    %882 = vmatpush1.bf16.msra.mxu0 0
    %883 = vmatprep.subr.bf16.mxu0 0
    %884 = vmatpush1.bf16.msra.mxu0 0
    %885 = vmatprep.subr.bf16.mxu0 0
    %886 = vmatpush1.bf16.msra.mxu0 0
    %887 = vmatprep.subr.bf16.mxu0 0
    %888 = vmatpush1.bf16.msra.mxu0 0
    %889 = vmatprep.subr.bf16.mxu0 0
    %890 = vmatpush1.bf16.msra.mxu0 0
    %891 = vmatprep.mubr.bf16.mxu0 0
    %892 = vmatmul.mubr.bf16.gmra.mrb[0].mxu0 %v857
    %v893 = vpop.f32.mrb[0].mxu0
    %v894 = vadd.f32 0.0, %v893
    %v895 = vpop.f32.mrb[0].mxu0
    %v896 = vadd.f32 0.0, %v895
    %v897 = vpop.f32.mrb[0].mxu0
    %v898 = vpop.f32.mrb[0].mxu0
    %899 = vdwg.mxu0
    %v900 = vadd.f32 %v853, %v894
    %v901 = vadd.f32 %v854, %v896
    %v902 = vxor.u32 %v900, 2147483648
    %v903 = vxor.u32 %v901, 2147483648
    %v904 = vmul.f32 %v902, 1.442695
    %v905 = vpow.pop %v904
    %v906 = vmul.f32 %v903, 1.442695
    %v907 = vpow.pop %v906
    %v908 = vadd.f32 %v905, 1.0
    %v909 = vadd.f32 %v907, 1.0
    %v910 = vrcp.pop %v908
    %v911 = vmul.f32 1.0, %v910
    %v912 = vrcp.pop %v909
    %v913 = vmul.f32 1.0, %v912
    %v914 = vtanh.pop %v901
    %v915 = vmul.f32 %v911, %v841
    %917 = vrot.lane.b32.xlu0 %v914, 64
    %v918 = vpop.permute.xlu0 %917
    %v920 = vmul.f32 %v911, %v918
    %922 = vrot.lane.b32.xlu0 %v920, 64
    %v923 = vpop.permute.xlu0 %922
    %v925 = vadd.f32 %v915, %v923
    %v926 = vtanh.pop %v925
    %928 = vrot.lane.b32.xlu0 %v926, 64
    %v929 = vpop.permute.xlu0 %928
    %v931 = vmul.f32 %v913, %v929
    %932 = vst.msk [vmem:[%s337] sm:$0xff] %vm335, %v931
    %933 = vst.msk [vmem:[#allocation4] sm:$0xff] %vm338, %v931
    %v934 = vld [vmem:[#allocation4] sm:$0xff]
    %v935 = vld [vmem:[#allocation4 + $0x8] sm:$0xff]
    %v936 = vld [vmem:[#allocation4 + $0x10] sm:$0xff]
    %v937 = vld [vmem:[#allocation4 + $0x18] sm:$0xff]
    %v938 = vld [vmem:[#allocation4 + $0x20] sm:$0xff]
    %v939 = vld [vmem:[#allocation4 + $0x28] sm:$0xff]
    %v940 = vld [vmem:[#allocation4 + $0x30] sm:$0xff]
    %v941 = vld [vmem:[#allocation4 + $0x38] sm:$0xff]
    %v942 = vpack.c.bf16 %v935, %v934
    %v943 = vpack.c.bf16 %v937, %v936
    %v944 = vpack.c.bf16 %v939, %v938
    %v945 = vpack.c.bf16 %v941, %v940
    %v947 = vlaneseq
    %v948 = vshrl.u32 %v947, 7
    %v949 = vsub.s32 0, %v948
    %v950 = vrot.slane %v61, %v949
    %v951 = vlaneseq
    %v952 = vshrl.u32 %v951, 7
    %v953 = vsub.s32 1, %v952
    %v954 = vrot.slane %v61, %v953
    %v965 = vunpack.c.l.b16 %v47
    %v966 = vunpack.c.h.b16 %v47
    %v967 = vunpack.c.l.b16 %v48
    %v968 = vunpack.c.h.b16 %v48
    %v969 = vunpack.c.l.b16 %v49
    %v970 = vunpack.c.h.b16 %v49
    %v971 = vunpack.c.l.b16 %v50
    %v972 = vunpack.c.h.b16 %v50
    %v973 = vunpack.c.l.b16 %v51
    %v974 = vunpack.c.h.b16 %v51
    %v975 = vunpack.c.l.b16 %v52
    %v976 = vunpack.c.h.b16 %v52
    %v977 = vunpack.c.l.b16 %v53
    %v978 = vunpack.c.h.b16 %v53
    %v979 = vunpack.c.l.b16 %v54
    %v980 = vunpack.c.h.b16 %v54
    %v981 = vpack.c.b16 %v967, %v965
    %v982 = vpack.c.b16 %v968, %v966
    %v983 = vpack.c.b16 %v971, %v969
    %v984 = vpack.c.b16 %v972, %v970
    %v985 = vpack.c.b16 %v975, %v973
    %v986 = vpack.c.b16 %v976, %v974
    %v987 = vpack.c.b16 %v979, %v977
    %v988 = vpack.c.b16 %v980, %v978
    %v998 = vsel %vm258, %v942, 0
    %v1001 = vsel %vm258, %v943, 0
    %v1004 = vsel %vm258, %v944, 0
    %v1007 = vsel %vm258, %v945, 0
    %1009 = vmatprep.subr.bf16.mxu0 %v982
    %1010 = vmatpush1.bf16.msra.mxu0 %v981
    %1011 = vmatprep.subr.bf16.mxu0 %v984
    %1012 = vmatpush1.bf16.msra.mxu0 %v983
    %1013 = vmatprep.subr.bf16.mxu0 %v986
    %1014 = vmatpush1.bf16.msra.mxu0 %v985
    %1015 = vmatprep.subr.bf16.mxu0 %v988
    %1016 = vmatpush1.bf16.msra.mxu0 %v987
    %1017 = vmatprep.subr.bf16.mxu0 0
    %1018 = vmatpush1.bf16.msra.mxu0 0
    %1019 = vmatprep.subr.bf16.mxu0 0
    %1020 = vmatpush1.bf16.msra.mxu0 0
    %1021 = vmatprep.subr.bf16.mxu0 0
    %1022 = vmatpush1.bf16.msra.mxu0 0
    %1023 = vmatprep.subr.bf16.mxu0 0
    %1024 = vmatpush1.bf16.msra.mxu0 0
    %1025 = vmatprep.subr.bf16.mxu0 0
    %1026 = vmatpush1.bf16.msra.mxu0 0
    %1027 = vmatprep.subr.bf16.mxu0 0
    %1028 = vmatpush1.bf16.msra.mxu0 0
    %1029 = vmatprep.subr.bf16.mxu0 0
    %1030 = vmatpush1.bf16.msra.mxu0 0
    %1031 = vmatprep.subr.bf16.mxu0 0
    %1032 = vmatpush1.bf16.msra.mxu0 0
    %1033 = vmatprep.subr.bf16.mxu0 0
    %1034 = vmatpush1.bf16.msra.mxu0 0
    %1035 = vmatprep.subr.bf16.mxu0 0
    %1036 = vmatpush1.bf16.msra.mxu0 0
    %1037 = vmatprep.subr.bf16.mxu0 0
    %1038 = vmatpush1.bf16.msra.mxu0 0
    %1039 = vmatprep.subr.bf16.mxu0 0
    %1040 = vmatpush1.bf16.msra.mxu0 0
    %1041 = vmatprep.mubr.bf16.mxu0 0
    %1042 = vmatmul.mubr.bf16.gmra.mrb[0].mxu0 %v998
    %v1043 = vpop.f32.mrb[0].mxu0
    %v1044 = vadd.f32 %v950, %v1043
    %v1045 = vpop.f32.mrb[0].mxu0
    %v1046 = vadd.f32 %v954, %v1045
    %v1047 = vpop.f32.mrb[0].mxu0
    %v1048 = vadd.f32 %v950, %v1047
    %v1049 = vpop.f32.mrb[0].mxu0
    %v1050 = vadd.f32 %v954, %v1049
    %1051 = vmatprep.mubr.bf16.mxu0 0
    %1052 = vmatmul.mubr.bf16.gmra.mrb[0].mxu0 %v1001
    %v1053 = vpop.f32.mrb[0].mxu0
    %v1054 = vadd.f32 %v950, %v1053
    %v1055 = vpop.f32.mrb[0].mxu0
    %v1056 = vadd.f32 %v954, %v1055
    %v1057 = vpop.f32.mrb[0].mxu0
    %v1058 = vadd.f32 %v950, %v1057
    %v1059 = vpop.f32.mrb[0].mxu0
    %v1060 = vadd.f32 %v954, %v1059
    %1061 = vmatprep.mubr.bf16.mxu0 0
    %1062 = vmatmul.mubr.bf16.gmra.mrb[0].mxu0 %v1004
    %v1063 = vpop.f32.mrb[0].mxu0
    %v1064 = vadd.f32 %v950, %v1063
    %v1065 = vpop.f32.mrb[0].mxu0
    %v1066 = vadd.f32 %v954, %v1065
    %v1067 = vpop.f32.mrb[0].mxu0
    %v1068 = vadd.f32 %v950, %v1067
    %v1069 = vpop.f32.mrb[0].mxu0
    %v1070 = vadd.f32 %v954, %v1069
    %1071 = vmatprep.mubr.bf16.mxu0 0
    %1072 = vmatmul.mubr.bf16.gmra.mrb[0].mxu0 %v1007
    %v1073 = vpop.f32.mrb[0].mxu0
    %v1074 = vadd.f32 %v950, %v1073
    %v1075 = vpop.f32.mrb[0].mxu0
    %v1076 = vadd.f32 %v954, %v1075
    %v1077 = vpop.f32.mrb[0].mxu0
    %v1078 = vadd.f32 %v950, %v1077
    %v1079 = vpop.f32.mrb[0].mxu0
    %v1080 = vadd.f32 %v954, %v1079
    %1081 = vdwg.mxu0
    %1082 = vst [vmem:[#allocation3] sm:$0xff] %v1044
    %1083 = vst [vmem:[#allocation3 + $0x8] sm:$0xff] %v1046
    %1084 = vst [vmem:[#allocation3 + $0x10] sm:$0xff] %v1048
    %1085 = vst [vmem:[#allocation3 + $0x18] sm:$0xff] %v1050
    %1086 = vst [vmem:[#allocation3 + $0x20] sm:$0xff] %v1054
    %1087 = vst [vmem:[#allocation3 + $0x28] sm:$0xff] %v1056
    %1088 = vst [vmem:[#allocation3 + $0x30] sm:$0xff] %v1058
    %1089 = vst [vmem:[#allocation3 + $0x38] sm:$0xff] %v1060
    %1090 = vst [vmem:[#allocation3 + $0x40] sm:$0xff] %v1064
    %1091 = vst [vmem:[#allocation3 + $0x48] sm:$0xff] %v1066
    %1092 = vst [vmem:[#allocation3 + $0x50] sm:$0xff] %v1068
    %1093 = vst [vmem:[#allocation3 + $0x58] sm:$0xff] %v1070
    %1094 = vst [vmem:[#allocation3 + $0x60] sm:$0xff] %v1074
    %1095 = vst [vmem:[#allocation3 + $0x68] sm:$0xff] %v1076
    %1096 = vst [vmem:[#allocation3 + $0x70] sm:$0xff] %v1078
    %1097 = vst [vmem:[#allocation3 + $0x78] sm:$0xff] %v1080
    %s1098 = smul.addr %s213, 8
    %s1099 = scalar_lea.vmem [#allocation3], %s1098
    %v1100 = vld [vmem:[%s1099] sm:$0xff]
    %v1105 = vunpack.c.l.b16 %v55
    %v1106 = vunpack.c.l.b16 %v56
    %v1107 = vunpack.c.l.b16 %v57
    %v1108 = vunpack.c.l.b16 %v58
    %v1109 = vpack.c.b16 %v1106, %v1105
    %v1110 = vpack.c.b16 %v1108, %v1107
    %v1113 = vsel %vm335, 0, 0
    %1115 = vmatprep.subr.bf16.mxu0 0
    %1116 = vmatpush1.bf16.msra.mxu0 %v1109
    %1117 = vmatprep.subr.bf16.mxu0 0
    %1118 = vmatpush1.bf16.msra.mxu0 %v1110
    %1119 = vmatprep.subr.bf16.mxu0 0
    %1120 = vmatpush1.bf16.msra.mxu0 0
    %1121 = vmatprep.subr.bf16.mxu0 0
    %1122 = vmatpush1.bf16.msra.mxu0 0
    %1123 = vmatprep.subr.bf16.mxu0 0
    %1124 = vmatpush1.bf16.msra.mxu0 0
    %1125 = vmatprep.subr.bf16.mxu0 0
    %1126 = vmatpush1.bf16.msra.mxu0 0
    %1127 = vmatprep.subr.bf16.mxu0 0
    %1128 = vmatpush1.bf16.msra.mxu0 0
    %1129 = vmatprep.subr.bf16.mxu0 0
    %1130 = vmatpush1.bf16.msra.mxu0 0
    %1131 = vmatprep.subr.bf16.mxu0 0
    %1132 = vmatpush1.bf16.msra.mxu0 0
    %1133 = vmatprep.subr.bf16.mxu0 0
    %1134 = vmatpush1.bf16.msra.mxu0 0
    %1135 = vmatprep.subr.bf16.mxu0 0
    %1136 = vmatpush1.bf16.msra.mxu0 0
    %1137 = vmatprep.subr.bf16.mxu0 0
    %1138 = vmatpush1.bf16.msra.mxu0 0
    %1139 = vmatprep.subr.bf16.mxu0 0
    %1140 = vmatpush1.bf16.msra.mxu0 0
    %1141 = vmatprep.subr.bf16.mxu0 0
    %1142 = vmatpush1.bf16.msra.mxu0 0
    %1143 = vmatprep.subr.bf16.mxu0 0
    %1144 = vmatpush1.bf16.msra.mxu0 0
    %1145 = vmatprep.subr.bf16.mxu0 0
    %1146 = vmatpush1.bf16.msra.mxu0 0
    %1147 = vmatprep.mubr.bf16.mxu0 0
    %1148 = vmatmul.mubr.bf16.gmra.mrb[0].mxu0 %v1113
    %v1149 = vpop.f32.mrb[0].mxu0
    %v1150 = vadd.f32 0.0, %v1149
    %v1151 = vpop.f32.mrb[0].mxu0
    %v1152 = vpop.f32.mrb[0].mxu0
    %v1153 = vpop.f32.mrb[0].mxu0
    %1154 = vdwg.mxu0
    %v1155 = vadd.f32 %v1100, %v1150
    %v1156 = vxor.u32 %v1155, 2147483648
    %v1157 = vmul.f32 %v1156, 1.442695
    %v1158 = vpow.pop %v1157
    %v1159 = vadd.f32 %v1158, 1.0
    %v1160 = vrcp.pop %v1159
    %v1161 = vmul.f32 1.0, %v1160
    %v1162 = vtanh.pop %v1155
    %v1163 = vmul.f32 %v1161, 0.0
    %1165 = vrot.lane.b32.xlu0 %v1162, 32
    %v1166 = vpop.permute.xlu0 %1165
    %v1168 = vmul.f32 %v1161, %v1166
    %1170 = vrot.lane.b32.xlu0 %v1168, 32
    %v1171 = vpop.permute.xlu0 %1170
    %v1173 = vadd.f32 %v1163, %v1171
    %v1174 = vtanh.pop %v1173
    %1176 = vrot.lane.b32.xlu0 %v1174, 32
    %v1177 = vpop.permute.xlu0 %1176
    %v1179 = vmul.f32 %v1161, %v1177
    %s1180 = smul.addr %s340, 8
    %s1181 = scalar_lea.vmem [#allocation3], %s1180
    %v1182 = vld [vmem:[%s1181] sm:$0xff]
    %v1183 = vpack.c.bf16 %v1179, %v1179
    %1185 = vrot.lane.b32.xlu0 %v1183, 64
    %v1186 = vpop.permute.xlu0 %1185
    %v1188 = vsel %vm335, %v1186, 0
    %1190 = vmatprep.subr.bf16.mxu0 0
    %1191 = vmatpush1.bf16.msra.mxu0 %v1109
    %1192 = vmatprep.subr.bf16.mxu0 0
    %1193 = vmatpush1.bf16.msra.mxu0 %v1110
    %1194 = vmatprep.subr.bf16.mxu0 0
    %1195 = vmatpush1.bf16.msra.mxu0 0
    %1196 = vmatprep.subr.bf16.mxu0 0
    %1197 = vmatpush1.bf16.msra.mxu0 0
    %1198 = vmatprep.subr.bf16.mxu0 0
    %1199 = vmatpush1.bf16.msra.mxu0 0
    %1200 = vmatprep.subr.bf16.mxu0 0
    %1201 = vmatpush1.bf16.msra.mxu0 0
    %1202 = vmatprep.subr.bf16.mxu0 0
    %1203 = vmatpush1.bf16.msra.mxu0 0
    %1204 = vmatprep.subr.bf16.mxu0 0
    %1205 = vmatpush1.bf16.msra.mxu0 0
    %1206 = vmatprep.subr.bf16.mxu0 0
    %1207 = vmatpush1.bf16.msra.mxu0 0
    %1208 = vmatprep.subr.bf16.mxu0 0
    %1209 = vmatpush1.bf16.msra.mxu0 0
    %1210 = vmatprep.subr.bf16.mxu0 0
    %1211 = vmatpush1.bf16.msra.mxu0 0
    %1212 = vmatprep.subr.bf16.mxu0 0
    %1213 = vmatpush1.bf16.msra.mxu0 0
    %1214 = vmatprep.subr.bf16.mxu0 0
    %1215 = vmatpush1.bf16.msra.mxu0 0
    %1216 = vmatprep.subr.bf16.mxu0 0
    %1217 = vmatpush1.bf16.msra.mxu0 0
    %1218 = vmatprep.subr.bf16.mxu0 0
    %1219 = vmatpush1.bf16.msra.mxu0 0
    %1220 = vmatprep.subr.bf16.mxu0 0
    %1221 = vmatpush1.bf16.msra.mxu0 0
    %1222 = vmatprep.mubr.bf16.mxu0 0
    %1223 = vmatmul.mubr.bf16.gmra.mrb[0].mxu0 %v1188
    %v1224 = vpop.f32.mrb[0].mxu0
    %v1225 = vadd.f32 0.0, %v1224
    %v1226 = vpop.f32.mrb[0].mxu0
    %v1227 = vpop.f32.mrb[0].mxu0
    %v1228 = vpop.f32.mrb[0].mxu0
    %1229 = vdwg.mxu0
    %v1230 = vadd.f32 %v1182, %v1225
    %v1231 = vxor.u32 %v1230, 2147483648
    %v1232 = vmul.f32 %v1231, 1.442695
    %v1233 = vpow.pop %v1232
    %v1234 = vadd.f32 %v1233, 1.0
    %v1235 = vrcp.pop %v1234
    %v1236 = vmul.f32 1.0, %v1235
    %v1237 = vtanh.pop %v1230
    %v1238 = vmul.f32 %v1236, %v1173
    %1240 = vrot.lane.b32.xlu0 %v1237, 32
    %v1241 = vpop.permute.xlu0 %1240
    %v1243 = vmul.f32 %v1236, %v1241
    %1245 = vrot.lane.b32.xlu0 %v1243, 32
    %v1246 = vpop.permute.xlu0 %1245
    %v1248 = vadd.f32 %v1238, %v1246
    %v1249 = vtanh.pop %v1248
    %1251 = vrot.lane.b32.xlu0 %v1249, 32
    %v1252 = vpop.permute.xlu0 %1251
    %v1254 = vmul.f32 %v1236, %v1252
    %s1255 = smul.addr %s426, 8
    %s1256 = scalar_lea.vmem [#allocation3], %s1255
    %v1257 = vld [vmem:[%s1256] sm:$0xff]
    %v1258 = vpack.c.bf16 %v1254, %v1254
    %1260 = vrot.lane.b32.xlu0 %v1258, 64
    %v1261 = vpop.permute.xlu0 %1260
    %v1263 = vsel %vm335, %v1261, 0
    %1265 = vmatprep.subr.bf16.mxu0 0
    %1266 = vmatpush1.bf16.msra.mxu0 %v1109
    %1267 = vmatprep.subr.bf16.mxu0 0
    %1268 = vmatpush1.bf16.msra.mxu0 %v1110
    %1269 = vmatprep.subr.bf16.mxu0 0
    %1270 = vmatpush1.bf16.msra.mxu0 0
    %1271 = vmatprep.subr.bf16.mxu0 0
    %1272 = vmatpush1.bf16.msra.mxu0 0
    %1273 = vmatprep.subr.bf16.mxu0 0
    %1274 = vmatpush1.bf16.msra.mxu0 0
    %1275 = vmatprep.subr.bf16.mxu0 0
    %1276 = vmatpush1.bf16.msra.mxu0 0
    %1277 = vmatprep.subr.bf16.mxu0 0
    %1278 = vmatpush1.bf16.msra.mxu0 0
    %1279 = vmatprep.subr.bf16.mxu0 0
    %1280 = vmatpush1.bf16.msra.mxu0 0
    %1281 = vmatprep.subr.bf16.mxu0 0
    %1282 = vmatpush1.bf16.msra.mxu0 0
    %1283 = vmatprep.subr.bf16.mxu0 0
    %1284 = vmatpush1.bf16.msra.mxu0 0
    %1285 = vmatprep.subr.bf16.mxu0 0
    %1286 = vmatpush1.bf16.msra.mxu0 0
    %1287 = vmatprep.subr.bf16.mxu0 0
    %1288 = vmatpush1.bf16.msra.mxu0 0
    %1289 = vmatprep.subr.bf16.mxu0 0
    %1290 = vmatpush1.bf16.msra.mxu0 0
    %1291 = vmatprep.subr.bf16.mxu0 0
    %1292 = vmatpush1.bf16.msra.mxu0 0
    %1293 = vmatprep.subr.bf16.mxu0 0
    %1294 = vmatpush1.bf16.msra.mxu0 0
    %1295 = vmatprep.subr.bf16.mxu0 0
    %1296 = vmatpush1.bf16.msra.mxu0 0
    %1297 = vmatprep.mubr.bf16.mxu0 0
    %1298 = vmatmul.mubr.bf16.gmra.mrb[0].mxu0 %v1263
    %v1299 = vpop.f32.mrb[0].mxu0
    %v1300 = vadd.f32 0.0, %v1299
    %v1301 = vpop.f32.mrb[0].mxu0
    %v1302 = vpop.f32.mrb[0].mxu0
    %v1303 = vpop.f32.mrb[0].mxu0
    %1304 = vdwg.mxu0
    %v1305 = vadd.f32 %v1257, %v1300
    %v1306 = vxor.u32 %v1305, 2147483648
    %v1307 = vmul.f32 %v1306, 1.442695
    %v1308 = vpow.pop %v1307
    %v1309 = vadd.f32 %v1308, 1.0
    %v1310 = vrcp.pop %v1309
    %v1311 = vmul.f32 1.0, %v1310
    %v1312 = vtanh.pop %v1305
    %v1313 = vmul.f32 %v1311, %v1248
    %1315 = vrot.lane.b32.xlu0 %v1312, 32
    %v1316 = vpop.permute.xlu0 %1315
    %v1318 = vmul.f32 %v1311, %v1316
    %1320 = vrot.lane.b32.xlu0 %v1318, 32
    %v1321 = vpop.permute.xlu0 %1320
    %v1323 = vadd.f32 %v1313, %v1321
    %v1324 = vtanh.pop %v1323
    %1326 = vrot.lane.b32.xlu0 %v1324, 32
    %v1327 = vpop.permute.xlu0 %1326
    %v1329 = vmul.f32 %v1311, %v1327
    %s1330 = smul.addr %s512, 8
    %s1331 = scalar_lea.vmem [#allocation3], %s1330
    %v1332 = vld [vmem:[%s1331] sm:$0xff]
    %v1333 = vpack.c.bf16 %v1329, %v1329
    %1335 = vrot.lane.b32.xlu0 %v1333, 64
    %v1336 = vpop.permute.xlu0 %1335
    %v1338 = vsel %vm335, %v1336, 0
    %1340 = vmatprep.subr.bf16.mxu0 0
    %1341 = vmatpush1.bf16.msra.mxu0 %v1109
    %1342 = vmatprep.subr.bf16.mxu0 0
    %1343 = vmatpush1.bf16.msra.mxu0 %v1110
    %1344 = vmatprep.subr.bf16.mxu0 0
    %1345 = vmatpush1.bf16.msra.mxu0 0
    %1346 = vmatprep.subr.bf16.mxu0 0
    %1347 = vmatpush1.bf16.msra.mxu0 0
    %1348 = vmatprep.subr.bf16.mxu0 0
    %1349 = vmatpush1.bf16.msra.mxu0 0
    %1350 = vmatprep.subr.bf16.mxu0 0
    %1351 = vmatpush1.bf16.msra.mxu0 0
    %1352 = vmatprep.subr.bf16.mxu0 0
    %1353 = vmatpush1.bf16.msra.mxu0 0
    %1354 = vmatprep.subr.bf16.mxu0 0
    %1355 = vmatpush1.bf16.msra.mxu0 0
    %1356 = vmatprep.subr.bf16.mxu0 0
    %1357 = vmatpush1.bf16.msra.mxu0 0
    %1358 = vmatprep.subr.bf16.mxu0 0
    %1359 = vmatpush1.bf16.msra.mxu0 0
    %1360 = vmatprep.subr.bf16.mxu0 0
    %1361 = vmatpush1.bf16.msra.mxu0 0
    %1362 = vmatprep.subr.bf16.mxu0 0
    %1363 = vmatpush1.bf16.msra.mxu0 0
    %1364 = vmatprep.subr.bf16.mxu0 0
    %1365 = vmatpush1.bf16.msra.mxu0 0
    %1366 = vmatprep.subr.bf16.mxu0 0
    %1367 = vmatpush1.bf16.msra.mxu0 0
    %1368 = vmatprep.subr.bf16.mxu0 0
    %1369 = vmatpush1.bf16.msra.mxu0 0
    %1370 = vmatprep.subr.bf16.mxu0 0
    %1371 = vmatpush1.bf16.msra.mxu0 0
    %1372 = vmatprep.mubr.bf16.mxu0 0
    %1373 = vmatmul.mubr.bf16.gmra.mrb[0].mxu0 %v1338
    %v1374 = vpop.f32.mrb[0].mxu0
    %v1375 = vadd.f32 0.0, %v1374
    %v1376 = vpop.f32.mrb[0].mxu0
    %v1377 = vpop.f32.mrb[0].mxu0
    %v1378 = vpop.f32.mrb[0].mxu0
    %1379 = vdwg.mxu0
    %v1380 = vadd.f32 %v1332, %v1375
    %v1381 = vxor.u32 %v1380, 2147483648
    %v1382 = vmul.f32 %v1381, 1.442695
    %v1383 = vpow.pop %v1382
    %v1384 = vadd.f32 %v1383, 1.0
    %v1385 = vrcp.pop %v1384
    %v1386 = vmul.f32 1.0, %v1385
    %v1387 = vtanh.pop %v1380
    %v1388 = vmul.f32 %v1386, %v1323
    %1390 = vrot.lane.b32.xlu0 %v1387, 32
    %v1391 = vpop.permute.xlu0 %1390
    %v1393 = vmul.f32 %v1386, %v1391
    %1395 = vrot.lane.b32.xlu0 %v1393, 32
    %v1396 = vpop.permute.xlu0 %1395
    %v1398 = vadd.f32 %v1388, %v1396
    %v1399 = vtanh.pop %v1398
    %1401 = vrot.lane.b32.xlu0 %v1399, 32
    %v1402 = vpop.permute.xlu0 %1401
    %v1404 = vmul.f32 %v1386, %v1402
    %s1405 = smul.addr %s598, 8
    %s1406 = scalar_lea.vmem [#allocation3], %s1405
    %v1407 = vld [vmem:[%s1406] sm:$0xff]
    %v1408 = vpack.c.bf16 %v1404, %v1404
    %1410 = vrot.lane.b32.xlu0 %v1408, 64
    %v1411 = vpop.permute.xlu0 %1410
    %v1413 = vsel %vm335, %v1411, 0
    %1415 = vmatprep.subr.bf16.mxu0 0
    %1416 = vmatpush1.bf16.msra.mxu0 %v1109
    %1417 = vmatprep.subr.bf16.mxu0 0
    %1418 = vmatpush1.bf16.msra.mxu0 %v1110
    %1419 = vmatprep.subr.bf16.mxu0 0
    %1420 = vmatpush1.bf16.msra.mxu0 0
    %1421 = vmatprep.subr.bf16.mxu0 0
    %1422 = vmatpush1.bf16.msra.mxu0 0
    %1423 = vmatprep.subr.bf16.mxu0 0
    %1424 = vmatpush1.bf16.msra.mxu0 0
    %1425 = vmatprep.subr.bf16.mxu0 0
    %1426 = vmatpush1.bf16.msra.mxu0 0
    %1427 = vmatprep.subr.bf16.mxu0 0
    %1428 = vmatpush1.bf16.msra.mxu0 0
    %1429 = vmatprep.subr.bf16.mxu0 0
    %1430 = vmatpush1.bf16.msra.mxu0 0
    %1431 = vmatprep.subr.bf16.mxu0 0
    %1432 = vmatpush1.bf16.msra.mxu0 0
    %1433 = vmatprep.subr.bf16.mxu0 0
    %1434 = vmatpush1.bf16.msra.mxu0 0
    %1435 = vmatprep.subr.bf16.mxu0 0
    %1436 = vmatpush1.bf16.msra.mxu0 0
    %1437 = vmatprep.subr.bf16.mxu0 0
    %1438 = vmatpush1.bf16.msra.mxu0 0
    %1439 = vmatprep.subr.bf16.mxu0 0
    %1440 = vmatpush1.bf16.msra.mxu0 0
    %1441 = vmatprep.subr.bf16.mxu0 0
    %1442 = vmatpush1.bf16.msra.mxu0 0
    %1443 = vmatprep.subr.bf16.mxu0 0
    %1444 = vmatpush1.bf16.msra.mxu0 0
    %1445 = vmatprep.subr.bf16.mxu0 0
    %1446 = vmatpush1.bf16.msra.mxu0 0
    %1447 = vmatprep.mubr.bf16.mxu0 0
    %1448 = vmatmul.mubr.bf16.gmra.mrb[0].mxu0 %v1413
    %v1449 = vpop.f32.mrb[0].mxu0
    %v1450 = vadd.f32 0.0, %v1449
    %v1451 = vpop.f32.mrb[0].mxu0
    %v1452 = vpop.f32.mrb[0].mxu0
    %v1453 = vpop.f32.mrb[0].mxu0
    %1454 = vdwg.mxu0
    %v1455 = vadd.f32 %v1407, %v1450
    %v1456 = vxor.u32 %v1455, 2147483648
    %v1457 = vmul.f32 %v1456, 1.442695
    %v1458 = vpow.pop %v1457
    %v1459 = vadd.f32 %v1458, 1.0
    %v1460 = vrcp.pop %v1459
    %v1461 = vmul.f32 1.0, %v1460
    %v1462 = vtanh.pop %v1455
    %v1463 = vmul.f32 %v1461, %v1398
    %1465 = vrot.lane.b32.xlu0 %v1462, 32
    %v1466 = vpop.permute.xlu0 %1465
    %v1468 = vmul.f32 %v1461, %v1466
    %1470 = vrot.lane.b32.xlu0 %v1468, 32
    %v1471 = vpop.permute.xlu0 %1470
    %v1473 = vadd.f32 %v1463, %v1471
    %v1474 = vtanh.pop %v1473
    %1476 = vrot.lane.b32.xlu0 %v1474, 32
    %v1477 = vpop.permute.xlu0 %1476
    %v1479 = vmul.f32 %v1461, %v1477
    %s1480 = smul.addr %s682, 8
    %s1481 = scalar_lea.vmem [#allocation3], %s1480
    %v1482 = vld [vmem:[%s1481] sm:$0xff]
    %v1483 = vpack.c.bf16 %v1479, %v1479
    %1485 = vrot.lane.b32.xlu0 %v1483, 64
    %v1486 = vpop.permute.xlu0 %1485
    %v1488 = vsel %vm335, %v1486, 0
    %1490 = vmatprep.subr.bf16.mxu0 0
    %1491 = vmatpush1.bf16.msra.mxu0 %v1109
    %1492 = vmatprep.subr.bf16.mxu0 0
    %1493 = vmatpush1.bf16.msra.mxu0 %v1110
    %1494 = vmatprep.subr.bf16.mxu0 0
    %1495 = vmatpush1.bf16.msra.mxu0 0
    %1496 = vmatprep.subr.bf16.mxu0 0
    %1497 = vmatpush1.bf16.msra.mxu0 0
    %1498 = vmatprep.subr.bf16.mxu0 0
    %1499 = vmatpush1.bf16.msra.mxu0 0
    %1500 = vmatprep.subr.bf16.mxu0 0
    %1501 = vmatpush1.bf16.msra.mxu0 0
    %1502 = vmatprep.subr.bf16.mxu0 0
    %1503 = vmatpush1.bf16.msra.mxu0 0
    %1504 = vmatprep.subr.bf16.mxu0 0
    %1505 = vmatpush1.bf16.msra.mxu0 0
    %1506 = vmatprep.subr.bf16.mxu0 0
    %1507 = vmatpush1.bf16.msra.mxu0 0
    %1508 = vmatprep.subr.bf16.mxu0 0
    %1509 = vmatpush1.bf16.msra.mxu0 0
    %1510 = vmatprep.subr.bf16.mxu0 0
    %1511 = vmatpush1.bf16.msra.mxu0 0
    %1512 = vmatprep.subr.bf16.mxu0 0
    %1513 = vmatpush1.bf16.msra.mxu0 0
    %1514 = vmatprep.subr.bf16.mxu0 0
    %1515 = vmatpush1.bf16.msra.mxu0 0
    %1516 = vmatprep.subr.bf16.mxu0 0
    %1517 = vmatpush1.bf16.msra.mxu0 0
    %1518 = vmatprep.subr.bf16.mxu0 0
    %1519 = vmatpush1.bf16.msra.mxu0 0
    %1520 = vmatprep.subr.bf16.mxu0 0
    %1521 = vmatpush1.bf16.msra.mxu0 0
    %1522 = vmatprep.mubr.bf16.mxu0 0
    %1523 = vmatmul.mubr.bf16.gmra.mrb[0].mxu0 %v1488
    %v1524 = vpop.f32.mrb[0].mxu0
    %v1525 = vadd.f32 0.0, %v1524
    %v1526 = vpop.f32.mrb[0].mxu0
    %v1527 = vpop.f32.mrb[0].mxu0
    %v1528 = vpop.f32.mrb[0].mxu0
    %1529 = vdwg.mxu0
    %v1530 = vadd.f32 %v1482, %v1525
    %v1531 = vxor.u32 %v1530, 2147483648
    %v1532 = vmul.f32 %v1531, 1.442695
    %v1533 = vpow.pop %v1532
    %v1534 = vadd.f32 %v1533, 1.0
    %v1535 = vrcp.pop %v1534
    %v1536 = vmul.f32 1.0, %v1535
    %v1537 = vtanh.pop %v1530
    %v1538 = vmul.f32 %v1536, %v1473
    %1540 = vrot.lane.b32.xlu0 %v1537, 32
    %v1541 = vpop.permute.xlu0 %1540
    %v1543 = vmul.f32 %v1536, %v1541
    %1545 = vrot.lane.b32.xlu0 %v1543, 32
    %v1546 = vpop.permute.xlu0 %1545
    %v1548 = vadd.f32 %v1538, %v1546
    %v1549 = vtanh.pop %v1548
    %1551 = vrot.lane.b32.xlu0 %v1549, 32
    %v1552 = vpop.permute.xlu0 %1551
    %v1554 = vmul.f32 %v1536, %v1552
    %s1555 = smul.addr %s766, 8
    %s1556 = scalar_lea.vmem [#allocation3], %s1555
    %v1557 = vld [vmem:[%s1556] sm:$0xff]
    %v1558 = vpack.c.bf16 %v1554, %v1554
    %1560 = vrot.lane.b32.xlu0 %v1558, 64
    %v1561 = vpop.permute.xlu0 %1560
    %v1563 = vsel %vm335, %v1561, 0
    %1565 = vmatprep.subr.bf16.mxu0 0
    %1566 = vmatpush1.bf16.msra.mxu0 %v1109
    %1567 = vmatprep.subr.bf16.mxu0 0
    %1568 = vmatpush1.bf16.msra.mxu0 %v1110
    %1569 = vmatprep.subr.bf16.mxu0 0
    %1570 = vmatpush1.bf16.msra.mxu0 0
    %1571 = vmatprep.subr.bf16.mxu0 0
    %1572 = vmatpush1.bf16.msra.mxu0 0
    %1573 = vmatprep.subr.bf16.mxu0 0
    %1574 = vmatpush1.bf16.msra.mxu0 0
    %1575 = vmatprep.subr.bf16.mxu0 0
    %1576 = vmatpush1.bf16.msra.mxu0 0
    %1577 = vmatprep.subr.bf16.mxu0 0
    %1578 = vmatpush1.bf16.msra.mxu0 0
    %1579 = vmatprep.subr.bf16.mxu0 0
    %1580 = vmatpush1.bf16.msra.mxu0 0
    %1581 = vmatprep.subr.bf16.mxu0 0
    %1582 = vmatpush1.bf16.msra.mxu0 0
    %1583 = vmatprep.subr.bf16.mxu0 0
    %1584 = vmatpush1.bf16.msra.mxu0 0
    %1585 = vmatprep.subr.bf16.mxu0 0
    %1586 = vmatpush1.bf16.msra.mxu0 0
    %1587 = vmatprep.subr.bf16.mxu0 0
    %1588 = vmatpush1.bf16.msra.mxu0 0
    %1589 = vmatprep.subr.bf16.mxu0 0
    %1590 = vmatpush1.bf16.msra.mxu0 0
    %1591 = vmatprep.subr.bf16.mxu0 0
    %1592 = vmatpush1.bf16.msra.mxu0 0
    %1593 = vmatprep.subr.bf16.mxu0 0
    %1594 = vmatpush1.bf16.msra.mxu0 0
    %1595 = vmatprep.subr.bf16.mxu0 0
    %1596 = vmatpush1.bf16.msra.mxu0 0
    %1597 = vmatprep.mubr.bf16.mxu0 0
    %1598 = vmatmul.mubr.bf16.gmra.mrb[0].mxu0 %v1563
    %v1599 = vpop.f32.mrb[0].mxu0
    %v1600 = vadd.f32 0.0, %v1599
    %v1601 = vpop.f32.mrb[0].mxu0
    %v1602 = vpop.f32.mrb[0].mxu0
    %v1603 = vpop.f32.mrb[0].mxu0
    %1604 = vdwg.mxu0
    %v1605 = vadd.f32 %v1557, %v1600
    %v1606 = vxor.u32 %v1605, 2147483648
    %v1607 = vmul.f32 %v1606, 1.442695
    %v1608 = vpow.pop %v1607
    %v1609 = vadd.f32 %v1608, 1.0
    %v1610 = vrcp.pop %v1609
    %v1611 = vmul.f32 1.0, %v1610
    %v1612 = vtanh.pop %v1605
    %v1613 = vmul.f32 %v1611, %v1548
    %1615 = vrot.lane.b32.xlu0 %v1612, 32
    %v1616 = vpop.permute.xlu0 %1615
    %v1618 = vmul.f32 %v1611, %v1616
    %1620 = vrot.lane.b32.xlu0 %v1618, 32
    %v1621 = vpop.permute.xlu0 %1620
    %v1623 = vadd.f32 %v1613, %v1621
    %v1624 = vtanh.pop %v1623
    %1626 = vrot.lane.b32.xlu0 %v1624, 32
    %v1627 = vpop.permute.xlu0 %1626
    %v1629 = vmul.f32 %v1611, %v1627
    %s1630 = smul.addr %s850, 8
    %s1631 = scalar_lea.vmem [#allocation3], %s1630
    %v1632 = vld [vmem:[%s1631] sm:$0xff]
    %v1633 = vpack.c.bf16 %v1629, %v1629
    %1635 = vrot.lane.b32.xlu0 %v1633, 64
    %v1636 = vpop.permute.xlu0 %1635
    %v1638 = vsel %vm335, %v1636, 0
    %1640 = vmatprep.subr.bf16.mxu0 0
    %1641 = vmatpush1.bf16.msra.mxu0 %v1109
    %1642 = vmatprep.subr.bf16.mxu0 0
    %1643 = vmatpush1.bf16.msra.mxu0 %v1110
    %1644 = vmatprep.subr.bf16.mxu0 0
    %1645 = vmatpush1.bf16.msra.mxu0 0
    %1646 = vmatprep.subr.bf16.mxu0 0
    %1647 = vmatpush1.bf16.msra.mxu0 0
    %1648 = vmatprep.subr.bf16.mxu0 0
    %1649 = vmatpush1.bf16.msra.mxu0 0
    %1650 = vmatprep.subr.bf16.mxu0 0
    %1651 = vmatpush1.bf16.msra.mxu0 0
    %1652 = vmatprep.subr.bf16.mxu0 0
    %1653 = vmatpush1.bf16.msra.mxu0 0
    %1654 = vmatprep.subr.bf16.mxu0 0
    %1655 = vmatpush1.bf16.msra.mxu0 0
    %1656 = vmatprep.subr.bf16.mxu0 0
    %1657 = vmatpush1.bf16.msra.mxu0 0
    %1658 = vmatprep.subr.bf16.mxu0 0
    %1659 = vmatpush1.bf16.msra.mxu0 0
    %1660 = vmatprep.subr.bf16.mxu0 0
    %1661 = vmatpush1.bf16.msra.mxu0 0
    %1662 = vmatprep.subr.bf16.mxu0 0
    %1663 = vmatpush1.bf16.msra.mxu0 0
    %1664 = vmatprep.subr.bf16.mxu0 0
    %1665 = vmatpush1.bf16.msra.mxu0 0
    %1666 = vmatprep.subr.bf16.mxu0 0
    %1667 = vmatpush1.bf16.msra.mxu0 0
    %1668 = vmatprep.subr.bf16.mxu0 0
    %1669 = vmatpush1.bf16.msra.mxu0 0
    %1670 = vmatprep.subr.bf16.mxu0 0
    %1671 = vmatpush1.bf16.msra.mxu0 0
    %1672 = vmatprep.mubr.bf16.mxu0 0
    %1673 = vmatmul.mubr.bf16.gmra.mrb[0].mxu0 %v1638
    %v1674 = vpop.f32.mrb[0].mxu0
    %v1675 = vadd.f32 0.0, %v1674
    %v1676 = vpop.f32.mrb[0].mxu0
    %v1677 = vpop.f32.mrb[0].mxu0
    %v1678 = vpop.f32.mrb[0].mxu0
    %1679 = vdwg.mxu0
    %v1680 = vadd.f32 %v1632, %v1675
    %v1681 = vxor.u32 %v1680, 2147483648
    %v1682 = vmul.f32 %v1681, 1.442695
    %v1683 = vpow.pop %v1682
    %v1684 = vadd.f32 %v1683, 1.0
    %v1685 = vrcp.pop %v1684
    %v1686 = vmul.f32 1.0, %v1685
    %v1687 = vtanh.pop %v1680
    %v1688 = vmul.f32 %v1686, %v1623
    %1690 = vrot.lane.b32.xlu0 %v1687, 32
    %v1691 = vpop.permute.xlu0 %1690
    %v1693 = vmul.f32 %v1686, %v1691
    %1695 = vrot.lane.b32.xlu0 %v1693, 32
    %v1696 = vpop.permute.xlu0 %1695
    %v1698 = vadd.f32 %v1688, %v1696
    %v1699 = vtanh.pop %v1698
    %1701 = vrot.lane.b32.xlu0 %v1699, 32
    %v1702 = vpop.permute.xlu0 %1701
    %v1704 = vmul.f32 %v1686, %v1702
    %v1705 = vld [vmem:[#allocation3 + $0x78] sm:$0xff]
    %v1706 = vxor.u32 %v1705, 2147483648
    %v1707 = vmul.f32 %v1706, 1.442695
    %v1708 = vpow.pop %v1707
    %v1709 = vadd.f32 %v1708, 1.0
    %v1710 = vrcp.pop %v1709
    %v1711 = vmul.f32 1.0, %v1710
    %v1712 = vtanh.pop %v1705
    %1714 = vrot.lane.b32.xlu0 %v1712, 32
    %v1715 = vpop.permute.xlu0 %1714
    %v1717 = vmul.f32 %v1711, %v1715
    %v1718 = vtanh.pop %v1717
    %1720 = vrot.lane.b32.xlu0 %v1718, 64
    %v1721 = vpop.permute.xlu0 %1720
    %v1723 = vmul.f32 %v1711, %v1721
    %v1724 = vld [vmem:[%s3] sm:$0xff]
    %v1725 = vld [vmem:[%s3 + $0x8] sm:$0xff]
    %v1726 = vld [vmem:[%s3 + $0x10] sm:$0xff]
    %v1727 = vld [vmem:[%s3 + $0x18] sm:$0xff]
    %v1728 = vld [vmem:[%s3 + $0x20] sm:$0xff]
    %v1729 = vld [vmem:[%s3 + $0x28] sm:$0xff]
    %v1730 = vld [vmem:[%s3 + $0x30] sm:$0xff]
    %v1731 = vld [vmem:[%s3 + $0x38] sm:$0xff]
    %1733 = vrot.lane.b32.xlu0 %v1723, 64
    %v1734 = vpop.permute.xlu0 %1733
    %v1735 = vsel %vm335, %v1734, 0
    %1737 = vmatprep.subr.mxu0 0.0
    %1738 = vmatpush1.msra.mxu0 %v1728
    %1739 = vmatprep.subr.mxu0 0.0
    %1740 = vmatpush1.msra.mxu0 %v1729
    %1741 = vmatprep.subr.mxu0 0.0
    %1742 = vmatpush1.msra.mxu0 %v1730
    %1743 = vmatprep.subr.mxu0 0.0
    %1744 = vmatpush1.msra.mxu0 %v1731
    %1745 = vmatprep.subr.mxu0 0.0
    %1746 = vmatpush1.msra.mxu0 0.0
    %1747 = vmatprep.subr.mxu0 0.0
    %1748 = vmatpush1.msra.mxu0 0.0
    %1749 = vmatprep.subr.mxu0 0.0
    %1750 = vmatpush1.msra.mxu0 0.0
    %1751 = vmatprep.subr.mxu0 0.0
    %1752 = vmatpush1.msra.mxu0 0.0
    %1753 = vmatprep.subr.mxu0 0.0
    %1754 = vmatpush1.msra.mxu0 0.0
    %1755 = vmatprep.subr.mxu0 0.0
    %1756 = vmatpush1.msra.mxu0 0.0
    %1757 = vmatprep.subr.mxu0 0.0
    %1758 = vmatpush1.msra.mxu0 0.0
    %1759 = vmatprep.subr.mxu0 0.0
    %1760 = vmatpush1.msra.mxu0 0.0
    %1761 = vmatprep.subr.mxu0 0.0
    %1762 = vmatpush1.msra.mxu0 0.0
    %1763 = vmatprep.subr.mxu0 0.0
    %1764 = vmatpush1.msra.mxu0 0.0
    %1765 = vmatprep.subr.mxu0 0.0
    %1766 = vmatpush1.msra.mxu0 0.0
    %1767 = vmatprep.subr.mxu0 0.0
    %1768 = vmatpush1.msra.mxu0 0.0
    %1769 = vmatprep.subr.mxu0 0.0
    %1770 = vmatpush1.msra.mxu0 0.0
    %1771 = vmatprep.subr.mxu0 0.0
    %1772 = vmatpush1.msra.mxu0 0.0
    %1773 = vmatprep.subr.mxu0 0.0
    %1774 = vmatpush1.msra.mxu0 0.0
    %1775 = vmatprep.subr.mxu0 0.0
    %1776 = vmatpush1.msra.mxu0 0.0
    %1777 = vmatprep.subr.mxu0 0.0
    %1778 = vmatpush1.msra.mxu0 0.0
    %1779 = vmatprep.subr.mxu0 0.0
    %1780 = vmatpush1.msra.mxu0 0.0
    %1781 = vmatprep.subr.mxu0 0.0
    %1782 = vmatpush1.msra.mxu0 0.0
    %1783 = vmatprep.subr.mxu0 0.0
    %1784 = vmatpush1.msra.mxu0 0.0
    %1785 = vmatprep.subr.mxu0 0.0
    %1786 = vmatpush1.msra.mxu0 0.0
    %1787 = vmatprep.subr.mxu0 0.0
    %1788 = vmatpush1.msra.mxu0 0.0
    %1789 = vmatprep.subr.mxu0 0.0
    %1790 = vmatpush1.msra.mxu0 0.0
    %1791 = vmatprep.subr.mxu0 0.0
    %1792 = vmatpush1.msra.mxu0 0.0
    %1793 = vmatprep.subr.mxu0 0.0
    %1794 = vmatpush1.msra.mxu0 0.0
    %1795 = vmatprep.subr.mxu0 0.0
    %1796 = vmatpush1.msra.mxu0 0.0
    %1797 = vmatprep.subr.mxu0 0.0
    %1798 = vmatpush1.msra.mxu0 0.0
    %1799 = vmatprep.subr.mxu0 0.0
    %1800 = vmatpush1.msra.mxu0 0.0
    %1801 = vmatprep.mubr.f32.mxu0 0.0
    %1802 = vmatmul.mubr.f32.gmra.mrb[0].mxu0 %v1735
    %v1803 = vpop.f32.mrb[0].mxu0
    %v1804 = vadd.f32 0.0, %v1803
    %v1805 = vpop.f32.mrb[0].mxu0
    %1806 = vdwg.mxu0
    %1808 = vrot.lane.b32.xlu0 %v1704, 64
    %v1809 = vpop.permute.xlu0 %1808
    %v1810 = vsel %vm335, %v1809, 0
    %1812 = vmatprep.subr.mxu0 0.0
    %1813 = vmatpush1.msra.mxu0 %v1724
    %1814 = vmatprep.subr.mxu0 0.0
    %1815 = vmatpush1.msra.mxu0 %v1725
    %1816 = vmatprep.subr.mxu0 0.0
    %1817 = vmatpush1.msra.mxu0 %v1726
    %1818 = vmatprep.subr.mxu0 0.0
    %1819 = vmatpush1.msra.mxu0 %v1727
    %1820 = vmatprep.subr.mxu0 0.0
    %1821 = vmatpush1.msra.mxu0 0.0
    %1822 = vmatprep.subr.mxu0 0.0
    %1823 = vmatpush1.msra.mxu0 0.0
    %1824 = vmatprep.subr.mxu0 0.0
    %1825 = vmatpush1.msra.mxu0 0.0
    %1826 = vmatprep.subr.mxu0 0.0
    %1827 = vmatpush1.msra.mxu0 0.0
    %1828 = vmatprep.subr.mxu0 0.0
    %1829 = vmatpush1.msra.mxu0 0.0
    %1830 = vmatprep.subr.mxu0 0.0
    %1831 = vmatpush1.msra.mxu0 0.0
    %1832 = vmatprep.subr.mxu0 0.0
    %1833 = vmatpush1.msra.mxu0 0.0
    %1834 = vmatprep.subr.mxu0 0.0
    %1835 = vmatpush1.msra.mxu0 0.0
    %1836 = vmatprep.subr.mxu0 0.0
    %1837 = vmatpush1.msra.mxu0 0.0
    %1838 = vmatprep.subr.mxu0 0.0
    %1839 = vmatpush1.msra.mxu0 0.0
    %1840 = vmatprep.subr.mxu0 0.0
    %1841 = vmatpush1.msra.mxu0 0.0
    %1842 = vmatprep.subr.mxu0 0.0
    %1843 = vmatpush1.msra.mxu0 0.0
    %1844 = vmatprep.subr.mxu0 0.0
    %1845 = vmatpush1.msra.mxu0 0.0
    %1846 = vmatprep.subr.mxu0 0.0
    %1847 = vmatpush1.msra.mxu0 0.0
    %1848 = vmatprep.subr.mxu0 0.0
    %1849 = vmatpush1.msra.mxu0 0.0
    %1850 = vmatprep.subr.mxu0 0.0
    %1851 = vmatpush1.msra.mxu0 0.0
    %1852 = vmatprep.subr.mxu0 0.0
    %1853 = vmatpush1.msra.mxu0 0.0
    %1854 = vmatprep.subr.mxu0 0.0
    %1855 = vmatpush1.msra.mxu0 0.0
    %1856 = vmatprep.subr.mxu0 0.0
    %1857 = vmatpush1.msra.mxu0 0.0
    %1858 = vmatprep.subr.mxu0 0.0
    %1859 = vmatpush1.msra.mxu0 0.0
    %1860 = vmatprep.subr.mxu0 0.0
    %1861 = vmatpush1.msra.mxu0 0.0
    %1862 = vmatprep.subr.mxu0 0.0
    %1863 = vmatpush1.msra.mxu0 0.0
    %1864 = vmatprep.subr.mxu0 0.0
    %1865 = vmatpush1.msra.mxu0 0.0
    %1866 = vmatprep.subr.mxu0 0.0
    %1867 = vmatpush1.msra.mxu0 0.0
    %1868 = vmatprep.subr.mxu0 0.0
    %1869 = vmatpush1.msra.mxu0 0.0
    %1870 = vmatprep.subr.mxu0 0.0
    %1871 = vmatpush1.msra.mxu0 0.0
    %1872 = vmatprep.subr.mxu0 0.0
    %1873 = vmatpush1.msra.mxu0 0.0
    %1874 = vmatprep.subr.mxu0 0.0
    %1875 = vmatpush1.msra.mxu0 0.0
    %1876 = vmatprep.mubr.f32.mxu0 0.0
    %1877 = vmatmul.mubr.f32.gmra.mrb[0].mxu0 %v1810
    %v1878 = vpop.f32.mrb[0].mxu0
    %v1879 = vadd.f32 %v1804, %v1878
    %v1880 = vpop.f32.mrb[0].mxu0
    %1881 = vdwg.mxu0
    %v1882 = vld [vmem:[#allocation5] sm:$0x1]
    %v1884 = vlaneseq
    %v1885 = vshrl.u32 %v1884, 7
    %v1886 = vsub.s32 0, %v1885
    %v1887 = vrot.slane %v1882, %v1886
    %v1889 = vadd.f32 %v1879, %v1887
    %vm1890 = vcmask 7168
    %1891 = vst.msk [vmem:[%s5] sm:$0xff] %vm1890, %v1889
    // Predicated region
    $region26: #{tpu_custom_call.1} parent=1 // pred_check
      _
    $region27: #{tpu_custom_call.1} parent=1 // pred_check_branch
      %1893 = sbr.rel (0) target = $region29
    $region28: #{tpu_custom_call.1} parent=1 // pred_region
      _
    $region29: #{tpu_custom_call.1} parent=1 // pred_fallthru
      _
    // Predicated region
    $region30: #{tpu_custom_call.1} parent=1 // pred_check
      _
    $region31: #{tpu_custom_call.1} parent=1 // pred_check_branch
      %1895 = sbr.rel (0) target = $region33
    $region32: #{tpu_custom_call.1} parent=1 // pred_region
      _
    $region33: #{tpu_custom_call.1} parent=1 // pred_fallthru
      _
    %1896 = vsyncpa [#allocation7], 1

</llo_original>
